<compile_context>
chip_gen: v7x
topology: tpu7x:2x2x1
jax: 0.10.0
libtpu: 0.0.40
codegen_flags: <defaults>
</compile_context>

<pallas_src>
import functools

import jax
import jax.numpy as jnp
from jax import lax
from jax.experimental import pallas as pl
from jax.experimental.pallas import tpu as pltpu


def _round_up(x, m):
    return (x + m - 1) // m * m


def _default_vmem_limit():
    # Size the scoped VMEM limit off the real chip: ~96 MiB on v5e/v6e (128 MiB
    # physical), ~48 MiB on v7x (64 MiB physical).
    try:
        cap = int(pltpu.get_tpu_info().vmem_capacity_bytes)
    except Exception:
        cap = 64 * 1024 * 1024
    return min(cap * 3 // 4, 100 * 1024 * 1024)


_VMEM_LIMIT = _default_vmem_limit()
_TILE_BUDGET = int(_VMEM_LIMIT * 0.7)   # headroom for compiler-internal scratch


# --------------------------------------------------------------------------------------
# Kernels
# --------------------------------------------------------------------------------------
def _write_stats(stat_ref, acc):
    """Row 0 <- per-channel sum, row 1 <- per-channel sum-of-squares, rows 2..7 zero."""
    cp = stat_ref.shape[-1]
    s = jnp.broadcast_to(jnp.sum(acc, axis=0, keepdims=True), (8, cp))
    q = jnp.broadcast_to(jnp.sum(acc * acc, axis=0, keepdims=True), (8, cp))
    row = lax.broadcasted_iota(jnp.int32, (8, cp), 0)
    stat_ref[...] = jnp.where(row == 0, s, jnp.where(row == 1, q, 0.0))


def _gemm_stats_kernel(p_ref, w_ref, stat_ref):
    # Recompute path, phase 1: GEMM for statistics only — no conv intermediate to HBM.
    acc = jnp.dot(p_ref[...], w_ref[...], preferred_element_type=jnp.float32)
    _write_stats(stat_ref, acc)


def _gemm_store_stats_kernel(p_ref, w_ref, y_ref, stat_ref):
    # Store path, phase 1: GEMM, store bf16 conv output + stats from the f32 accumulator.
    acc = jnp.dot(p_ref[...], w_ref[...], preferred_element_type=jnp.float32)
    y_ref[...] = acc.astype(y_ref.dtype)
    _write_stats(stat_ref, acc)


def _gemm_bn_act_kernel(p_ref, w_ref, scale_ref, bias_ref, o_ref, *, neg_slope):
    # Recompute path, phase 2: redo the GEMM and fuse BN + LeakyReLU on the fresh f32 acc.
    acc = jnp.dot(p_ref[...], w_ref[...], preferred_element_type=jnp.float32)
    y = acc * scale_ref[...] + bias_ref[...]
    o_ref[...] = jnp.where(y >= 0, y, neg_slope * y).astype(o_ref.dtype)


def _bn_act_kernel(y_ref, scale_ref, bias_ref, o_ref, *, neg_slope):
    # Store path, phase 2: elementwise BN + LeakyReLU over the stored conv output.
    y = y_ref[...].astype(jnp.float32) * scale_ref[...] + bias_ref[...]
    o_ref[...] = jnp.where(y >= 0, y, neg_slope * y).astype(o_ref.dtype)


# --------------------------------------------------------------------------------------
# Wrapper
# --------------------------------------------------------------------------------------
def _pick_tm(block_m, M, kcp, cp, in_bytes, y_bytes, budget):
    tm = min(block_m, _round_up(M, 8))

    def ws(t):   # double-buffered patches + weights + y/out + stats
        return (2 * t * kcp * in_bytes + 2 * kcp * cp * in_bytes
                + 2 * t * cp * y_bytes + 4 * 8 * cp * 4)

    while tm > 8 and ws(tm) > budget:
        tm = max(8, _round_up(tm // 2, 8))
    if M > 8:  # guarantee >= 2 grid steps so both v7x TensorCores get work
        tm = min(tm, _round_up((M + 1) // 2, 8))
    return tm


@functools.partial(
    jax.jit,
    static_argnames=("stride", "eps", "neg_slope", "block_m",
                     "compute_dtype", "out_dtype"))
def basic_conv(x_nchw, w_oihw, gamma, beta, *, stride=1, eps=1e-5, neg_slope=0.1,
               block_m=1024, compute_dtype=jnp.bfloat16, out_dtype=jnp.bfloat16):
    """BasicConv forward. x_nchw: (N, Cin, H, W), w_oihw: (Cout, Cin, K, K)."""
    N, Cin, H, W = x_nchw.shape
    Cout, _, K, _ = w_oihw.shape
    pad = K // 2
    Ho = (H + 2 * pad - K) // stride + 1
    Wo = (W + 2 * pad - K) // stride + 1
    M = N * Ho * Wo
    Kc = Cin * K * K

    in_bytes = jnp.dtype(compute_dtype).itemsize
    y_bytes = jnp.dtype(out_dtype).itemsize

    # ---- wrapper glue: NHWC + im2col so the conv is ONE wide MXU GEMM per tile ----
    x_nhwc = jnp.transpose(x_nchw, (0, 2, 3, 1)).astype(compute_dtype)
    # patches[n, ho, wo, c*K*K + kh*K + kw] = x_padded[n, ho*stride+kh, wo*stride+kw, c]
    patches = lax.conv_general_dilated_patches(
        x_nhwc, (K, K), (stride, stride),
        padding=((pad, pad), (pad, pad)),
        dimension_numbers=("NHWC", "HWIO", "NHWC"))
    patches = patches.reshape(M, Kc)

    # Channel-major weight flattening to match the patch feature ordering.
    w_flat = jnp.transpose(w_oihw, (1, 2, 3, 0)).reshape(Kc, Cout).astype(compute_dtype)

    Cp = _round_up(max(Cout, 128), 128)              # lane-dense output channels
    kc_align = 8 * max(1, 4 // in_bytes)             # bf16 -> 16 (sublane pairs)
    Kcp = _round_up(Kc, kc_align)

    TM = _pick_tm(block_m, M, Kcp, Cp, in_bytes, y_bytes, _TILE_BUDGET)
    Mp = _round_up(M, TM)
    n_tiles = Mp // TM

    patches = jnp.pad(patches, ((0, Mp - M), (0, Kcp - Kc)))
    w_flat = jnp.pad(w_flat, ((0, Kcp - Kc), (0, Cp - Cout)))

    cparams = pltpu.CompilerParams(dimension_semantics=("parallel",),
                                   vmem_limit_bytes=_VMEM_LIMIT)

    patch_spec = pl.BlockSpec((TM, Kcp), lambda i: (i, 0))
    w_spec = pl.BlockSpec((Kcp, Cp), lambda i: (0, 0))     # grid-invariant: fetched once
    stat_spec = pl.BlockSpec((8, Cp), lambda i: (i, 0))
    stat_shape = jax.ShapeDtypeStruct((8 * n_tiles, Cp), jnp.float32)
    sb_spec = pl.BlockSpec((1, Cp), lambda i: (0, 0))

    # Recompute the (cheap, small-Kc) GEMM in phase 2 when re-reading the patches is
    # cheaper than writing + re-reading the conv intermediate through HBM.
    use_recompute = Kcp * in_bytes <= 2 * Cp * y_bytes

    # ---- phase 1: conv GEMM + per-tile channel statistics ----
    if use_recompute:
        stats = pl.pallas_call(
            _gemm_stats_kernel,
            out_shape=stat_shape,
            grid=(n_tiles,),
            in_specs=[patch_spec, w_spec],
            out_specs=stat_spec,
            compiler_params=cparams,
            cost_estimate=pl.CostEstimate(
                flops=2 * Mp * Kcp * Cp, transcendentals=0,
                bytes_accessed=(Mp * Kcp * in_bytes + Kcp * Cp * in_bytes
                                + 8 * n_tiles * Cp * 4)),
        )(patches, w_flat)
        y_conv = None
    else:
        y_conv, stats = pl.pallas_call(
            _gemm_store_stats_kernel,
            out_shape=(jax.ShapeDtypeStruct((Mp, Cp), out_dtype), stat_shape),
            grid=(n_tiles,),
            in_specs=[patch_spec, w_spec],
            out_specs=(pl.BlockSpec((TM, Cp), lambda i: (i, 0)), stat_spec),
            compiler_params=cparams,
            cost_estimate=pl.CostEstimate(
                flops=2 * Mp * Kcp * Cp, transcendentals=0,
                bytes_accessed=(Mp * Kcp * in_bytes + Kcp * Cp * in_bytes
                                + Mp * Cp * y_bytes + 8 * n_tiles * Cp * 4)),
        )(patches, w_flat)

    # ---- tiny cross-tile reduction + fold BN into per-channel scale/bias (f32) ----
    stats = stats.reshape(n_tiles, 8, Cp)
    ch_sum = jnp.sum(stats[:, 0, :], axis=0)               # padded rows contribute zeros
    ch_ssq = jnp.sum(stats[:, 1, :], axis=0)
    mean = ch_sum / M
    var = jnp.maximum(ch_ssq / M - mean * mean, 0.0)        # biased batch variance
    gamma_p = jnp.pad(gamma.astype(jnp.float32), (0, Cp - Cout))
    beta_p = jnp.pad(beta.astype(jnp.float32), (0, Cp - Cout))
    scale_v = gamma_p * lax.rsqrt(var + eps)
    scale = scale_v.reshape(1, Cp)
    bias = (beta_p - mean * scale_v).reshape(1, Cp)

    # ---- phase 2: BN + LeakyReLU ----
    if use_recompute:
        out_flat = pl.pallas_call(
            functools.partial(_gemm_bn_act_kernel, neg_slope=neg_slope),
            out_shape=jax.ShapeDtypeStruct((Mp, Cp), out_dtype),
            grid=(n_tiles,),
            in_specs=[patch_spec, w_spec, sb_spec, sb_spec],
            out_specs=pl.BlockSpec((TM, Cp), lambda i: (i, 0)),
            compiler_params=cparams,
            cost_estimate=pl.CostEstimate(
                flops=2 * Mp * Kcp * Cp + 4 * Mp * Cp, transcendentals=0,
                bytes_accessed=(Mp * Kcp * in_bytes + Kcp * Cp * in_bytes
                                + Mp * Cp * y_bytes + 2 * Cp * 4)),
        )(patches, w_flat, scale, bias)
    else:
        # Elementwise pass: use a (much) larger row tile and write in place.
        TM2 = TM
        while (TM2 * 2 <= 4096 and Mp % (TM2 * 2) == 0
               and 4 * (TM2 * 2) * Cp * y_bytes <= _TILE_BUDGET):
            TM2 *= 2
        out_flat = pl.pallas_call(
            functools.partial(_bn_act_kernel, neg_slope=neg_slope),
            out_shape=jax.ShapeDtypeStruct((Mp, Cp), out_dtype),
            grid=(Mp // TM2,),
            in_specs=[pl.BlockSpec((TM2, Cp), lambda i: (i, 0)), sb_spec, sb_spec],
            out_specs=pl.BlockSpec((TM2, Cp), lambda i: (i, 0)),
            input_output_aliases={0: 0},
            compiler_params=cparams,
            cost_estimate=pl.CostEstimate(
                flops=4 * Mp * Cp, transcendentals=0,
                bytes_accessed=2 * Mp * Cp * y_bytes + 2 * Cp * 4),
        )(y_conv, scale, bias)

    out = out_flat[:M, :Cout].reshape(N, Ho, Wo, Cout)
    return jnp.transpose(out, (0, 3, 1, 2))                 # NCHW


if __name__ == "__main__":
    key = jax.random.PRNGKey(0)
    k1, k2, k3, k4 = jax.random.split(key, 4)

    def reference(x, w, gamma, beta, stride, eps=1e-5, slope=0.1):
        # Pure-JAX reference with the same bf16 conv inputs and f32 accumulation.
        K = w.shape[-1]
        xb = jnp.transpose(x, (0, 2, 3, 1)).astype(jnp.bfloat16)
        wb = jnp.transpose(w, (2, 3, 1, 0)).astype(jnp.bfloat16)       # HWIO
        conv = lax.conv_general_dilated(
            xb, wb, (stride, stride), ((K // 2, K // 2), (K // 2, K // 2)),
            dimension_numbers=("NHWC", "HWIO", "NHWC"),
            preferred_element_type=jnp.float32)
        mu = jnp.mean(conv, axis=(0, 1, 2))
        var = jnp.mean((conv - mu) ** 2, axis=(0, 1, 2))
        y = (conv - mu) * lax.rsqrt(var + eps) * gamma + beta
        y = jnp.where(y >= 0, y, slope * y)
        return jnp.transpose(y, (0, 3, 1, 2))

    # Case 1: shallow layer -> recompute path. BasicConv(4, 8, kernel_size=3, stride=1).
    N, Cin, H, W, Cout, K = 2, 4, 16, 16, 8, 3
    x = jax.random.normal(k1, (N, Cin, H, W), dtype=jnp.float32)
    w = jax.random.normal(k2, (Cout, Cin, K, K), dtype=jnp.float32) * (2.0 / (Cin * K * K)) ** 0.5
    gamma = 1.0 + 0.1 * jax.random.normal(k3, (Cout,), dtype=jnp.float32)
    beta = 0.1 * jax.random.normal(k4, (Cout,), dtype=jnp.float32)

    out = jax.block_until_ready(basic_conv(x, w, gamma, beta, stride=1))
    assert out.shape == (N, Cout, H, W), out.shape
    err1 = float(jnp.max(jnp.abs(out.astype(jnp.float32) - reference(x, w, gamma, beta, 1))))
    assert err1 < 6e-2, f"recompute-path max abs err: {err1}"

    # Case 2: deeper layer, stride 2 -> store path (Kc > 2*Cp). BasicConv(32, 8, 3, 2).
    N2, Cin2, H2, W2, Cout2, K2 = 2, 32, 8, 8, 8, 3
    x2 = jax.random.normal(k1, (N2, Cin2, H2, W2), dtype=jnp.float32)
    w2 = jax.random.normal(k2, (Cout2, Cin2, K2, K2), dtype=jnp.float32) * (2.0 / (Cin2 * K2 * K2)) ** 0.5
    g2 = 1.0 + 0.1 * jax.random.normal(k3, (Cout2,), dtype=jnp.float32)
    b2 = 0.1 * jax.random.normal(k4, (Cout2,), dtype=jnp.float32)

    out2 = jax.block_until_ready(basic_conv(x2, w2, g2, b2, stride=2))
    assert out2.shape == (N2, Cout2, H2 // 2, W2 // 2), out2.shape
    err2 = float(jnp.max(jnp.abs(out2.astype(jnp.float32) - reference(x2, w2, g2, b2, 2))))
    assert err2 < 6e-2, f"store-path max abs err: {err2}"

    print("KERNEL_OK")
</pallas_src>

<mosaic_0001>
module attributes {stable_mosaic.version = 11 : i64} {
  func.func @_gemm_stats_kernel(%arg0: i32, %arg1: memref<256x48xbf16, #tpu.memory_space<vmem>>, %arg2: memref<48x128xbf16, #tpu.memory_space<vmem>>, %arg3: memref<8x128xf32, #tpu.memory_space<vmem>>) attributes {dimension_semantics = [#tpu.dimension_semantics<parallel>], iteration_bounds = array<i64: 2>, scalar_prefetch = 0 : i64, scratch_operands = 0 : i64, tpu.core_type = #tpu.core_type<tc>, window_params = [{transform_indices = @transform_0, window_bounds = array<i64: 256, 48>}, {pipeline_mode = #tpu.pipeline_mode<synchronous>, transform_indices = @transform_1, window_bounds = array<i64: 48, 128>}, {transform_indices = @transform_2, window_bounds = array<i64: 8, 128>}]} {
    %c0 = arith.constant 0 : index
    %c0_0 = arith.constant 0 : index
    %0 = vector.load %arg1[%c0, %c0_0] : memref<256x48xbf16, #tpu.memory_space<vmem>>, vector<256x48xbf16>
    %c0_1 = arith.constant 0 : index
    %c0_2 = arith.constant 0 : index
    %1 = vector.load %arg2[%c0_1, %c0_2] : memref<48x128xbf16, #tpu.memory_space<vmem>>, vector<48x128xbf16>
    %cst = arith.constant dense<0.000000e+00> : vector<256x128xf32>
    %2 = tpu.matmul %0, %1, %cst {dimension_numbers = #tpu.dot_dimension_numbers<[1], [0], [0], [1], [0, 0, 1, 1], [], []>} : vector<256x48xbf16>, vector<48x128xbf16>, vector<256x128xf32> -> vector<256x128xf32>
    %cst_3 = arith.constant dense<0.000000e+00> : vector<128xf32>
    %3 = vector.multi_reduction <add>, %2, %cst_3 [0] : vector<256x128xf32> to vector<128xf32>
    %4 = vector.shape_cast %3 : vector<128xf32> to vector<1x128xf32>
    %5 = vector.shape_cast %4 : vector<1x128xf32> to vector<1x128xf32>
    %6 = vector.broadcast %5 : vector<1x128xf32> to vector<8x128xf32>
    %7 = arith.mulf %2, %2 : vector<256x128xf32>
    %cst_4 = arith.constant dense<0.000000e+00> : vector<128xf32>
    %8 = vector.multi_reduction <add>, %7, %cst_4 [0] : vector<256x128xf32> to vector<128xf32>
    %9 = vector.shape_cast %8 : vector<128xf32> to vector<1x128xf32>
    %10 = vector.shape_cast %9 : vector<1x128xf32> to vector<1x128xf32>
    %11 = vector.broadcast %10 : vector<1x128xf32> to vector<8x128xf32>
    %12 = tpu.iota {dimensions = array<i32: 0>} : vector<8x128xi32>
    %c0_i32 = arith.constant 0 : i32
    %13 = vector.broadcast %c0_i32 : i32 to vector<8x128xi32>
    %14 = arith.cmpi eq, %12, %13 : vector<8x128xi32>
    %c1_i32 = arith.constant 1 : i32
    %15 = vector.broadcast %c1_i32 : i32 to vector<8x128xi32>
    %16 = arith.cmpi eq, %12, %15 : vector<8x128xi32>
    %cst_5 = arith.constant 0.000000e+00 : f32
    %17 = vector.broadcast %cst_5 : f32 to vector<8x128xf32>
    %18 = arith.select %16, %11, %17 : vector<8x128xi1>, vector<8x128xf32>
    %19 = arith.select %14, %6, %18 : vector<8x128xi1>, vector<8x128xf32>
    %c0_6 = arith.constant 0 : index
    %c0_7 = arith.constant 0 : index
    %20 = vector.load %arg3[%c0_6, %c0_7] : memref<8x128xf32, #tpu.memory_space<vmem>>, vector<8x128xf32>
    tpu.vector_store %arg3[%c0_6, %c0_7], %19 {strides = array<i32>} : memref<8x128xf32, #tpu.memory_space<vmem>>, vector<8x128xf32>,
    return
  }
  func.func @transform_0(%arg0: i32) -> (i32, i32) {
    %c0_i32 = arith.constant 0 : i32
    %c0_i32_0 = arith.constant 0 : i32
    return %arg0, %c0_i32 : i32, i32
  }
  func.func @transform_1(%arg0: i32) -> (i32, i32) {
    %c0_i32 = arith.constant 0 : i32
    %c0_i32_0 = arith.constant 0 : i32
    %c0_i32_1 = arith.constant 0 : i32
    return %c0_i32, %c0_i32_0 : i32, i32
  }
  func.func @transform_2(%arg0: i32) -> (i32, i32) {
    %c0_i32 = arith.constant 0 : i32
    %c0_i32_0 = arith.constant 0 : i32
    return %arg0, %c0_i32 : i32, i32
  }
}

module attributes {stable_mosaic.version = 11 : i64} {
  func.func @_gemm_bn_act_kernel(%arg0: i32, %arg1: memref<256x48xbf16, #tpu.memory_space<vmem>>, %arg2: memref<48x128xbf16, #tpu.memory_space<vmem>>, %arg3: memref<1x128xf32, #tpu.memory_space<vmem>>, %arg4: memref<1x128xf32, #tpu.memory_space<vmem>>, %arg5: memref<256x128xbf16, #tpu.memory_space<vmem>>) attributes {dimension_semantics = [#tpu.dimension_semantics<parallel>], iteration_bounds = array<i64: 2>, scalar_prefetch = 0 : i64, scratch_operands = 0 : i64, tpu.core_type = #tpu.core_type<tc>, window_params = [{transform_indices = @transform_0, window_bounds = array<i64: 256, 48>}, {pipeline_mode = #tpu.pipeline_mode<synchronous>, transform_indices = @transform_1, window_bounds = array<i64: 48, 128>}, {pipeline_mode = #tpu.pipeline_mode<synchronous>, transform_indices = @transform_2, window_bounds = array<i64: 1, 128>}, {pipeline_mode = #tpu.pipeline_mode<synchronous>, transform_indices = @transform_3, window_bounds = array<i64: 1, 128>}, {transform_indices = @transform_4, window_bounds = array<i64: 256, 128>}]} {
    %c0 = arith.constant 0 : index
    %c0_0 = arith.constant 0 : index
    %0 = vector.load %arg1[%c0, %c0_0] : memref<256x48xbf16, #tpu.memory_space<vmem>>, vector<256x48xbf16>
    %c0_1 = arith.constant 0 : index
    %c0_2 = arith.constant 0 : index
    %1 = vector.load %arg2[%c0_1, %c0_2] : memref<48x128xbf16, #tpu.memory_space<vmem>>, vector<48x128xbf16>
    %cst = arith.constant dense<0.000000e+00> : vector<256x128xf32>
    %2 = tpu.matmul %0, %1, %cst {dimension_numbers = #tpu.dot_dimension_numbers<[1], [0], [0], [1], [0, 0, 1, 1], [], []>} : vector<256x48xbf16>, vector<48x128xbf16>, vector<256x128xf32> -> vector<256x128xf32>
    %c0_3 = arith.constant 0 : index
    %c0_4 = arith.constant 0 : index
    %3 = vector.load %arg3[%c0_3, %c0_4] : memref<1x128xf32, #tpu.memory_space<vmem>>, vector<1x128xf32>
    %4 = vector.broadcast %3 : vector<1x128xf32> to vector<256x128xf32>
    %5 = arith.mulf %2, %4 : vector<256x128xf32>
    %c0_5 = arith.constant 0 : index
    %c0_6 = arith.constant 0 : index
    %6 = vector.load %arg4[%c0_5, %c0_6] : memref<1x128xf32, #tpu.memory_space<vmem>>, vector<1x128xf32>
    %7 = vector.broadcast %6 : vector<1x128xf32> to vector<256x128xf32>
    %8 = arith.addf %5, %7 : vector<256x128xf32>
    %cst_7 = arith.constant 0.000000e+00 : f32
    %9 = vector.broadcast %cst_7 : f32 to vector<256x128xf32>
    %10 = arith.cmpf oge, %8, %9 : vector<256x128xf32>
    %cst_8 = arith.constant 1.000000e-01 : f32
    %11 = vector.broadcast %cst_8 : f32 to vector<256x128xf32>
    %12 = arith.mulf %11, %8 : vector<256x128xf32>
    %13 = arith.select %10, %8, %12 : vector<256x128xi1>, vector<256x128xf32>
    %14 = arith.truncf %13 : vector<256x128xf32> to vector<256x128xbf16>
    %c0_9 = arith.constant 0 : index
    %c0_10 = arith.constant 0 : index
    %15 = vector.load %arg5[%c0_9, %c0_10] : memref<256x128xbf16, #tpu.memory_space<vmem>>, vector<256x128xbf16>
    tpu.vector_store %arg5[%c0_9, %c0_10], %14 {strides = array<i32>} : memref<256x128xbf16, #tpu.memory_space<vmem>>, vector<256x128xbf16>,
    return
  }
  func.func @transform_0(%arg0: i32) -> (i32, i32) {
    %c0_i32 = arith.constant 0 : i32
    %c0_i32_0 = arith.constant 0 : i32
    return %arg0, %c0_i32 : i32, i32
  }
  func.func @transform_1(%arg0: i32) -> (i32, i32) {
    %c0_i32 = arith.constant 0 : i32
    %c0_i32_0 = arith.constant 0 : i32
    %c0_i32_1 = arith.constant 0 : i32
    return %c0_i32, %c0_i32_0 : i32, i32
  }
  func.func @transform_2(%arg0: i32) -> (i32, i32) {
    %c0_i32 = arith.constant 0 : i32
    %c0_i32_0 = arith.constant 0 : i32
    %c0_i32_1 = arith.constant 0 : i32
    return %c0_i32, %c0_i32_0 : i32, i32
  }
  func.func @transform_3(%arg0: i32) -> (i32, i32) {
    %c0_i32 = arith.constant 0 : i32
    %c0_i32_0 = arith.constant 0 : i32
    %c0_i32_1 = arith.constant 0 : i32
    return %c0_i32, %c0_i32_0 : i32, i32
  }
  func.func @transform_4(%arg0: i32) -> (i32, i32) {
    %c0_i32 = arith.constant 0 : i32
    %c0_i32_0 = arith.constant 0 : i32
    return %arg0, %c0_i32 : i32, i32
  }
}

</mosaic_0001>

<llo_original>
// kernel: basic_conv.2
$region0: #{basic_conv.2}
  #allocation0 [shape = 'u32[]', space=smem, size = 0x4, offset = 0x4, fixed_abs, tag = 'smem constant byte address 0x4 - core index']
  #allocation1 [shape = 'u32[144,128]{1,0:T(1,128)}', space=vmem, size = 0x12000, scoped, tag = 'internal scratch']
  %s0 = inlined_call_operand.vmem [shape: bf16[512,48], index: 0, kind: input, shape index: {}]
  %s1 = inlined_call_operand.vmem [shape: bf16[48,128], index: 1, kind: input, shape index: {}]
  %s2 = inlined_call_operand.vmem [shape: f32[16,128], index: 2, kind: output, shape index: {}]
  %s3 = sld [smem:[#allocation0]]
  $region41: #{basic_conv.2} parent=0
    _
  %s5 = ssub.s32 1, %s3
  %s6 = scalar_select 0, %s5, %s3
  loop: start=0, step=1, limit=4
  $region2: #{basic_conv.2} parent=0 // loop_pre_header
    _
  $region3: #{basic_conv.2} parent=0 // loop_header
    %s8 = sphi 0, %s12
    %p9 = scmp.ge.s32.totalorder %s8, 4
    %s18 = sphi 0, %s20
    %s21 = sphi 0, %s18
    %s22 = sphi 0, %s21
    %s38 = sphi 0, %s22
    %s42 = sphi 0, %s42
    %s44 = sphi 0, %s42
    %s45 = sphi 0, %s44
    %s59 = sphi 0, %s45
    %s65 = sphi 0, %s67
    %s68 = sphi 0, %s65
    %s69 = sphi 0, %s68
    %s85 = sphi 0, %s69
  $region4: #{basic_conv.2} parent=0 // loop_header_branch
    %11 = sbr.rel (%p9) target = $region8
  $region5: #{basic_conv.2} parent=0 // loop_body
    %s13 = ssub.s32 %s8, 1
    %s14 = ssub.s32 %s8, 2
    %s15 = sadd.s32 %s8, 1
    %s16 = ssub.s32 %s8, %s15
    %p17 = scmp.eq.s32.totalorder %s16, 0
    %s19 = sadd.s32 %s18, 1
    %s20 = scalar_select %p17, %s18, %s19
    %p23 = pneg %p17
    %p24 = scmp.eq.s32.totalorder %s8, 1
    %p25 = por %p23, %p24
    %p26 = scmp.ne.s32.totalorder %s18, %s21
    %p27 = scmp.eq.s32.totalorder %s8, 0
    %p28 = por %p26, %p27
    %p29 = scmp.ne.s32.totalorder %s18, %s21
    %p30 = scmp.eq.s32.totalorder %s13, 1
    %p31 = por %p29, %p30
    %p32 = scmp.ne.s32.totalorder %s21, %s22
    %p33 = scmp.eq.s32.totalorder %s13, 0
    %p34 = por %p32, %p33
    %p35 = scmp.ne.s32.totalorder %s21, %s22
    %p36 = scmp.eq.s32.totalorder %s14, 1
    %p37 = por %p35, %p36
    %p39 = scmp.ne.s32.totalorder %s22, %s38
    %p40 = scmp.eq.s32.totalorder %s14, 0
    %p41 = por %p39, %p40
    %s43 = sadd.s32 %s42, 1
    %p46 = scmp.eq.s32.totalorder %s8, 1
    %p47 = scmp.ne.s32.totalorder %s42, %s44
    %p48 = scmp.eq.s32.totalorder %s8, 0
    %p49 = por %p47, %p48
    %p50 = scmp.ne.s32.totalorder %s42, %s44
    %p51 = scmp.eq.s32.totalorder %s13, 1
    %p52 = por %p50, %p51
    %p53 = scmp.ne.s32.totalorder %s44, %s45
    %p54 = scmp.eq.s32.totalorder %s13, 0
    %p55 = por %p53, %p54
    %p56 = scmp.ne.s32.totalorder %s44, %s45
    %p57 = scmp.eq.s32.totalorder %s14, 1
    %p58 = por %p56, %p57
    %p60 = scmp.ne.s32.totalorder %s45, %s59
    %p61 = scmp.eq.s32.totalorder %s14, 0
    %p62 = por %p60, %p61
    %s63 = ssub.s32 %s8, %s15
    %p64 = scmp.eq.s32.totalorder %s63, 0
    %s66 = sadd.s32 %s65, 1
    %s67 = scalar_select %p64, %s65, %s66
    %p70 = pneg %p64
    %p71 = scmp.eq.s32.totalorder %s8, 1
    %p72 = por %p70, %p71
    %p73 = scmp.ne.s32.totalorder %s65, %s68
    %p74 = scmp.eq.s32.totalorder %s8, 0
    %p75 = por %p73, %p74
    %p76 = scmp.ne.s32.totalorder %s65, %s68
    %p77 = scmp.eq.s32.totalorder %s13, 1
    %p78 = por %p76, %p77
    %p79 = scmp.ne.s32.totalorder %s68, %s69
    %p80 = scmp.eq.s32.totalorder %s13, 0
    %p81 = por %p79, %p80
    %p82 = scmp.ne.s32.totalorder %s68, %s69
    %p83 = scmp.eq.s32.totalorder %s14, 1
    %p84 = por %p82, %p83
    %p86 = scmp.ne.s32.totalorder %s69, %s85
    %p87 = scmp.eq.s32.totalorder %s14, 0
    %p88 = por %p86, %p87
    %p89 = scmp.le.s32.totalorder 1, %s8
    %p90 = scmp.lt.s32.totalorder %s8, 3
    %p91 = pnand %p89, %p90
    %p92 = pneg %p91
    // Predicated region
    $region9: #{basic_conv.2} parent=5 // pred_check
      _
    $region10: #{basic_conv.2} parent=5 // pred_check_branch
      %94 = sbr.rel (%p91) target = $region12
    $region11: #{basic_conv.2} parent=5 // pred_region
      %s95 = ssub.s32 %s8, 1
      // Predicated region
      $region13: #{basic_conv.2} parent=11 // pred_check
        %p96 = pneg %p55
      $region14: #{basic_conv.2} parent=11 // pred_check_branch
        %98 = sbr.rel (%p96) target = $region16
      $region15: #{basic_conv.2} parent=11 // pred_region
        _
      $region16: #{basic_conv.2} parent=11 // pred_fallthru
        _
    $region12: #{basic_conv.2} parent=5 // pred_fallthru
      _
    %p99 = scmp.lt.s32.totalorder %s8, 2
    // Predicated region
    $region17: #{basic_conv.2} parent=5 // pred_check
      %p100 = pneg %p99
    $region18: #{basic_conv.2} parent=5 // pred_check_branch
      %102 = sbr.rel (%p100) target = $region20
    $region19: #{basic_conv.2} parent=5 // pred_region
      // Predicated region
      $region21: #{basic_conv.2} parent=19 // pred_check
        %p103 = pneg %p28
      $region22: #{basic_conv.2} parent=19 // pred_check_branch
        %105 = sbr.rel (%p103) target = $region24
      $region23: #{basic_conv.2} parent=19 // pred_region
        %s106 = smul.u32 32, %s8
        %p107 = scmp.lt.s32.totalorder %s106, 63
        %s108 = scalar_select %p107, %s106, 63
        %s109 = smul.addr %s108, 4
        %s110 = scalar_lea.vmem %s0, %s109
        %s111 = smul.u32 32, %s8
      $region24: #{basic_conv.2} parent=19 // pred_fallthru
        _
    $region20: #{basic_conv.2} parent=5 // pred_fallthru
      _
    %p112 = scmp.le.s32.totalorder 1, %s8
    %p113 = scmp.lt.s32.totalorder %s8, 3
    %p114 = pnand %p112, %p113
    %p115 = pneg %p114
    // Predicated region
    $region25: #{basic_conv.2} parent=5 // pred_check
      _
    $region26: #{basic_conv.2} parent=5 // pred_check_branch
      %117 = sbr.rel (%p114) target = $region28
    $region27: #{basic_conv.2} parent=5 // pred_region
      %s118 = ssub.s32 %s8, 1
      %s119 = smul.u32 32, %s13
      %p120 = scmp.lt.s32.totalorder %s119, 63
      %s121 = scalar_select %p120, %s119, 63
      %s122 = smul.addr %s121, 4
      %s123 = scalar_lea.vmem %s0, %s122
      %p124 = pneg %p34
      %p125 = pneg %p31
      %p126 = pneg %p55
      %p127 = pneg %p52
      %p128 = pneg %p81
      %p129 = pneg %p78
      %p130 = scmp.lt.s32.totalorder %s13, 1
      %s131 = scalar_select %p130, %s13, 1
      %s132 = smul.addr %s131, 8
      %s133 = scalar_lea.vmem %s2, %s132
      %s134 = smul.u32 32, %s13
      %p135 = scmp.lt.s32.totalorder %s134, 63
      %s136 = scalar_select %p135, %s134, 63
      %s137 = smul.addr %s136, 4
      %s138 = scalar_lea.vmem %s0, %s137
      %s139 = smul.u32 32, %s13
      %p140 = scmp.lt.s32.totalorder %s13, 1
      %s141 = scalar_select %p140, %s13, 1
      %s142 = smul.addr %s141, 8
      %s143 = scalar_lea.vmem %s2, %s142
      %v145 = vld [vmem:[%s138] sm:$0xf]
      %v146 = vld [vmem:[%s138 + $0x4] sm:$0xf]
      %v147 = vld [vmem:[%s138 + $0x8] sm:$0xf]
      %v148 = vld [vmem:[%s138 + $0xc] sm:$0xf]
      %v149 = vld [vmem:[%s138 + $0x10] sm:$0xf]
      %v150 = vld [vmem:[%s138 + $0x14] sm:$0xf]
      %v151 = vld [vmem:[%s138 + $0x18] sm:$0xf]
      %v152 = vld [vmem:[%s138 + $0x1c] sm:$0xf]
      %v153 = vld [vmem:[%s138 + $0x20] sm:$0xf]
      %v154 = vld [vmem:[%s138 + $0x24] sm:$0xf]
      %v155 = vld [vmem:[%s138 + $0x28] sm:$0xf]
      %v156 = vld [vmem:[%s138 + $0x2c] sm:$0xf]
      %v157 = vld [vmem:[%s138 + $0x30] sm:$0xf]
      %v158 = vld [vmem:[%s138 + $0x34] sm:$0xf]
      %v159 = vld [vmem:[%s138 + $0x38] sm:$0xf]
      %v160 = vld [vmem:[%s138 + $0x3c] sm:$0xf]
      %v161 = vld [vmem:[%s138 + $0x40] sm:$0xf]
      %v162 = vld [vmem:[%s138 + $0x44] sm:$0xf]
      %v163 = vld [vmem:[%s138 + $0x48] sm:$0xf]
      %v164 = vld [vmem:[%s138 + $0x4c] sm:$0xf]
      %v165 = vld [vmem:[%s138 + $0x50] sm:$0xf]
      %v166 = vld [vmem:[%s138 + $0x54] sm:$0xf]
      %v167 = vld [vmem:[%s138 + $0x58] sm:$0xf]
      %v168 = vld [vmem:[%s138 + $0x5c] sm:$0xf]
      %v169 = vld [vmem:[%s138 + $0x60] sm:$0xf]
      %v170 = vld [vmem:[%s138 + $0x64] sm:$0xf]
      %v171 = vld [vmem:[%s138 + $0x68] sm:$0xf]
      %v172 = vld [vmem:[%s138 + $0x6c] sm:$0xf]
      %v173 = vld [vmem:[%s138 + $0x70] sm:$0xf]
      %v174 = vld [vmem:[%s138 + $0x74] sm:$0xf]
      %v175 = vld [vmem:[%s138 + $0x78] sm:$0xf]
      %v176 = vld [vmem:[%s138 + $0x7c] sm:$0xf]
      %v177 = vld [vmem:[%s1] sm:$0xf]
      %v178 = vld [vmem:[%s1 + $0x4] sm:$0xf]
      %v179 = vld [vmem:[%s1 + $0x8] sm:$0xf]
      %v180 = vld [vmem:[%s1 + $0xc] sm:$0xf]
      %v181 = vld [vmem:[%s1 + $0x10] sm:$0xf]
      %v182 = vld [vmem:[%s1 + $0x14] sm:$0xf]
      %v215 = vunpack.c.l.b16 %v145
      %v216 = vunpack.c.l.b16 %v146
      %v217 = vunpack.c.l.b16 %v147
      %v218 = vunpack.c.l.b16 %v148
      %v219 = vunpack.c.l.b16 %v149
      %v220 = vunpack.c.l.b16 %v150
      %v221 = vunpack.c.l.b16 %v151
      %v222 = vunpack.c.l.b16 %v152
      %v223 = vunpack.c.l.b16 %v153
      %v224 = vunpack.c.l.b16 %v154
      %v225 = vunpack.c.l.b16 %v155
      %v226 = vunpack.c.l.b16 %v156
      %v227 = vunpack.c.l.b16 %v157
      %v228 = vunpack.c.l.b16 %v158
      %v229 = vunpack.c.l.b16 %v159
      %v230 = vunpack.c.l.b16 %v160
      %v231 = vunpack.c.l.b16 %v161
      %v232 = vunpack.c.l.b16 %v162
      %v233 = vunpack.c.l.b16 %v163
      %v234 = vunpack.c.l.b16 %v164
      %v235 = vunpack.c.l.b16 %v165
      %v236 = vunpack.c.l.b16 %v166
      %v237 = vunpack.c.l.b16 %v167
      %v238 = vunpack.c.l.b16 %v168
      %v239 = vunpack.c.l.b16 %v169
      %v240 = vunpack.c.l.b16 %v170
      %v241 = vunpack.c.l.b16 %v171
      %v242 = vunpack.c.l.b16 %v172
      %v243 = vunpack.c.l.b16 %v173
      %v244 = vunpack.c.l.b16 %v174
      %v245 = vunpack.c.l.b16 %v175
      %v246 = vunpack.c.l.b16 %v176
      %v247 = vpack.c.b16 %v216, %v215
      %v248 = vpack.c.b16 %v218, %v217
      %v249 = vpack.c.b16 %v220, %v219
      %v250 = vpack.c.b16 %v222, %v221
      %v251 = vpack.c.b16 %v224, %v223
      %v252 = vpack.c.b16 %v226, %v225
      %v253 = vpack.c.b16 %v228, %v227
      %v254 = vpack.c.b16 %v230, %v229
      %v255 = vpack.c.b16 %v232, %v231
      %v256 = vpack.c.b16 %v234, %v233
      %v257 = vpack.c.b16 %v236, %v235
      %v258 = vpack.c.b16 %v238, %v237
      %v259 = vpack.c.b16 %v240, %v239
      %v260 = vpack.c.b16 %v242, %v241
      %v261 = vpack.c.b16 %v244, %v243
      %v262 = vpack.c.b16 %v246, %v245
      %v269 = vunpack.c.l.b16 %v177
      %v270 = vunpack.c.l.b16 %v178
      %v271 = vunpack.c.l.b16 %v179
      %v272 = vunpack.c.l.b16 %v180
      %v273 = vunpack.c.l.b16 %v181
      %v274 = vunpack.c.l.b16 %v182
      %v275 = vpack.c.b16 %v270, %v269
      %v276 = vpack.c.b16 %v272, %v271
      %v277 = vpack.c.b16 %v274, %v273
      %vm281 = vcmask 392192
      %v283 = vsel %vm281, %v247, 0
      %v286 = vsel %vm281, %v248, 0
      %v289 = vsel %vm281, %v249, 0
      %v292 = vsel %vm281, %v250, 0
      %v295 = vsel %vm281, %v251, 0
      %v298 = vsel %vm281, %v252, 0
      %v301 = vsel %vm281, %v253, 0
      %v304 = vsel %vm281, %v254, 0
      %v307 = vsel %vm281, %v255, 0
      %v310 = vsel %vm281, %v256, 0
      %v313 = vsel %vm281, %v257, 0
      %v316 = vsel %vm281, %v258, 0
      %v319 = vsel %vm281, %v259, 0
      %v322 = vsel %vm281, %v260, 0
      %v325 = vsel %vm281, %v261, 0
      %v328 = vsel %vm281, %v262, 0
      %330 = vmatprep.subr.bf16.mxu0 0
      %331 = vmatpush1.bf16.msra.mxu0 %v275
      %332 = vmatprep.subr.bf16.mxu0 0
      %333 = vmatpush1.bf16.msra.mxu0 %v276
      %334 = vmatprep.subr.bf16.mxu0 0
      %335 = vmatpush1.bf16.msra.mxu0 %v277
      %336 = vmatprep.subr.bf16.mxu0 0
      %337 = vmatpush1.bf16.msra.mxu0 0
      %338 = vmatprep.subr.bf16.mxu0 0
      %339 = vmatpush1.bf16.msra.mxu0 0
      %340 = vmatprep.subr.bf16.mxu0 0
      %341 = vmatpush1.bf16.msra.mxu0 0
      %342 = vmatprep.subr.bf16.mxu0 0
      %343 = vmatpush1.bf16.msra.mxu0 0
      %344 = vmatprep.subr.bf16.mxu0 0
      %345 = vmatpush1.bf16.msra.mxu0 0
      %346 = vmatprep.subr.bf16.mxu0 0
      %347 = vmatpush1.bf16.msra.mxu0 0
      %348 = vmatprep.subr.bf16.mxu0 0
      %349 = vmatpush1.bf16.msra.mxu0 0
      %350 = vmatprep.subr.bf16.mxu0 0
      %351 = vmatpush1.bf16.msra.mxu0 0
      %352 = vmatprep.subr.bf16.mxu0 0
      %353 = vmatpush1.bf16.msra.mxu0 0
      %354 = vmatprep.subr.bf16.mxu0 0
      %355 = vmatpush1.bf16.msra.mxu0 0
      %356 = vmatprep.subr.bf16.mxu0 0
      %357 = vmatpush1.bf16.msra.mxu0 0
      %358 = vmatprep.subr.bf16.mxu0 0
      %359 = vmatpush1.bf16.msra.mxu0 0
      %360 = vmatprep.subr.bf16.mxu0 0
      %361 = vmatpush1.bf16.msra.mxu0 0
      %362 = vmatprep.mubr.bf16.mxu0 0
      %363 = vmatmul.mubr.bf16.gmra.mrb[0].mxu0 %v283
      %v364 = vpop.f32.mrb[0].mxu0
      %v365 = vadd.f32 0.0, %v364
      %v366 = vpop.f32.mrb[0].mxu0
      %v367 = vpop.f32.mrb[0].mxu0
      %v368 = vadd.f32 0.0, %v367
      %v369 = vpop.f32.mrb[0].mxu0
      %370 = vmatprep.mubr.bf16.mxu0 0
      %371 = vmatmul.mubr.bf16.gmra.mrb[0].mxu0 %v286
      %v372 = vpop.f32.mrb[0].mxu0
      %v373 = vadd.f32 0.0, %v372
      %v374 = vpop.f32.mrb[0].mxu0
      %v375 = vpop.f32.mrb[0].mxu0
      %v376 = vadd.f32 0.0, %v375
      %v377 = vpop.f32.mrb[0].mxu0
      %378 = vmatprep.mubr.bf16.mxu0 0
      %379 = vmatmul.mubr.bf16.gmra.mrb[0].mxu0 %v289
      %v380 = vpop.f32.mrb[0].mxu0
      %v381 = vadd.f32 0.0, %v380
      %v382 = vpop.f32.mrb[0].mxu0
      %v383 = vpop.f32.mrb[0].mxu0
      %v384 = vadd.f32 0.0, %v383
      %v385 = vpop.f32.mrb[0].mxu0
      %386 = vmatprep.mubr.bf16.mxu0 0
      %387 = vmatmul.mubr.bf16.gmra.mrb[0].mxu0 %v292
      %v388 = vpop.f32.mrb[0].mxu0
      %v389 = vadd.f32 0.0, %v388
      %v390 = vpop.f32.mrb[0].mxu0
      %v391 = vpop.f32.mrb[0].mxu0
      %v392 = vadd.f32 0.0, %v391
      %v393 = vpop.f32.mrb[0].mxu0
      %394 = vmatprep.mubr.bf16.mxu0 0
      %395 = vmatmul.mubr.bf16.gmra.mrb[0].mxu0 %v295
      %v396 = vpop.f32.mrb[0].mxu0
      %v397 = vadd.f32 0.0, %v396
      %v398 = vpop.f32.mrb[0].mxu0
      %v399 = vpop.f32.mrb[0].mxu0
      %v400 = vadd.f32 0.0, %v399
      %v401 = vpop.f32.mrb[0].mxu0
      %402 = vmatprep.mubr.bf16.mxu0 0
      %403 = vmatmul.mubr.bf16.gmra.mrb[0].mxu0 %v298
      %v404 = vpop.f32.mrb[0].mxu0
      %v405 = vadd.f32 0.0, %v404
      %v406 = vpop.f32.mrb[0].mxu0
      %v407 = vpop.f32.mrb[0].mxu0
      %v408 = vadd.f32 0.0, %v407
      %v409 = vpop.f32.mrb[0].mxu0
      %410 = vmatprep.mubr.bf16.mxu0 0
      %411 = vmatmul.mubr.bf16.gmra.mrb[0].mxu0 %v301
      %v412 = vpop.f32.mrb[0].mxu0
      %v413 = vadd.f32 0.0, %v412
      %v414 = vpop.f32.mrb[0].mxu0
      %v415 = vpop.f32.mrb[0].mxu0
      %v416 = vadd.f32 0.0, %v415
      %v417 = vpop.f32.mrb[0].mxu0
      %418 = vmatprep.mubr.bf16.mxu0 0
      %419 = vmatmul.mubr.bf16.gmra.mrb[0].mxu0 %v304
      %v420 = vpop.f32.mrb[0].mxu0
      %v421 = vadd.f32 0.0, %v420
      %v422 = vpop.f32.mrb[0].mxu0
      %v423 = vpop.f32.mrb[0].mxu0
      %v424 = vadd.f32 0.0, %v423
      %v425 = vpop.f32.mrb[0].mxu0
      %426 = vmatprep.mubr.bf16.mxu0 0
      %427 = vmatmul.mubr.bf16.gmra.mrb[0].mxu0 %v307
      %v428 = vpop.f32.mrb[0].mxu0
      %v429 = vadd.f32 0.0, %v428
      %v430 = vpop.f32.mrb[0].mxu0
      %v431 = vpop.f32.mrb[0].mxu0
      %v432 = vadd.f32 0.0, %v431
      %v433 = vpop.f32.mrb[0].mxu0
      %434 = vmatprep.mubr.bf16.mxu0 0
      %435 = vmatmul.mubr.bf16.gmra.mrb[0].mxu0 %v310
      %v436 = vpop.f32.mrb[0].mxu0
      %v437 = vadd.f32 0.0, %v436
      %v438 = vpop.f32.mrb[0].mxu0
      %v439 = vpop.f32.mrb[0].mxu0
      %v440 = vadd.f32 0.0, %v439
      %v441 = vpop.f32.mrb[0].mxu0
      %442 = vmatprep.mubr.bf16.mxu0 0
      %443 = vmatmul.mubr.bf16.gmra.mrb[0].mxu0 %v313
      %v444 = vpop.f32.mrb[0].mxu0
      %v445 = vadd.f32 0.0, %v444
      %v446 = vpop.f32.mrb[0].mxu0
      %v447 = vpop.f32.mrb[0].mxu0
      %v448 = vadd.f32 0.0, %v447
      %v449 = vpop.f32.mrb[0].mxu0
      %450 = vmatprep.mubr.bf16.mxu0 0
      %451 = vmatmul.mubr.bf16.gmra.mrb[0].mxu0 %v316
      %v452 = vpop.f32.mrb[0].mxu0
      %v453 = vadd.f32 0.0, %v452
      %v454 = vpop.f32.mrb[0].mxu0
      %v455 = vpop.f32.mrb[0].mxu0
      %v456 = vadd.f32 0.0, %v455
      %v457 = vpop.f32.mrb[0].mxu0
      %458 = vmatprep.mubr.bf16.mxu0 0
      %459 = vmatmul.mubr.bf16.gmra.mrb[0].mxu0 %v319
      %v460 = vpop.f32.mrb[0].mxu0
      %v461 = vadd.f32 0.0, %v460
      %v462 = vpop.f32.mrb[0].mxu0
      %v463 = vpop.f32.mrb[0].mxu0
      %v464 = vadd.f32 0.0, %v463
      %v465 = vpop.f32.mrb[0].mxu0
      %466 = vmatprep.mubr.bf16.mxu0 0
      %467 = vmatmul.mubr.bf16.gmra.mrb[0].mxu0 %v322
      %v468 = vpop.f32.mrb[0].mxu0
      %v469 = vadd.f32 0.0, %v468
      %v470 = vpop.f32.mrb[0].mxu0
      %v471 = vpop.f32.mrb[0].mxu0
      %v472 = vadd.f32 0.0, %v471
      %v473 = vpop.f32.mrb[0].mxu0
      %474 = vmatprep.mubr.bf16.mxu0 0
      %475 = vmatmul.mubr.bf16.gmra.mrb[0].mxu0 %v325
      %v476 = vpop.f32.mrb[0].mxu0
      %v477 = vadd.f32 0.0, %v476
      %v478 = vpop.f32.mrb[0].mxu0
      %v479 = vpop.f32.mrb[0].mxu0
      %v480 = vadd.f32 0.0, %v479
      %v481 = vpop.f32.mrb[0].mxu0
      %482 = vmatprep.mubr.bf16.mxu0 0
      %483 = vmatmul.mubr.bf16.gmra.mrb[0].mxu0 %v328
      %v484 = vpop.f32.mrb[0].mxu0
      %v485 = vadd.f32 0.0, %v484
      %v486 = vpop.f32.mrb[0].mxu0
      %v487 = vpop.f32.mrb[0].mxu0
      %v488 = vadd.f32 0.0, %v487
      %v489 = vpop.f32.mrb[0].mxu0
      %490 = vdwg.mxu0
      %v491 = vadd.f32 %v365, %v368
      %v492 = vadd.f32 %v491, %v373
      %v493 = vadd.f32 %v492, %v376
      %v494 = vadd.f32 %v493, %v381
      %v495 = vadd.f32 %v494, %v384
      %v496 = vadd.f32 %v495, %v389
      %v497 = vadd.f32 %v496, %v392
      %v498 = vadd.f32 %v497, %v397
      %v499 = vadd.f32 %v498, %v400
      %v500 = vadd.f32 %v499, %v405
      %v501 = vadd.f32 %v500, %v408
      %v502 = vadd.f32 %v501, %v413
      %v503 = vadd.f32 %v502, %v416
      %v504 = vadd.f32 %v503, %v421
      %v505 = vadd.f32 %v504, %v424
      %v506 = vadd.f32 %v505, %v429
      %v507 = vadd.f32 %v506, %v432
      %v508 = vadd.f32 %v507, %v437
      %v509 = vadd.f32 %v508, %v440
      %v510 = vadd.f32 %v509, %v445
      %v511 = vadd.f32 %v510, %v448
      %v512 = vadd.f32 %v511, %v453
      %v513 = vadd.f32 %v512, %v456
      %v514 = vadd.f32 %v513, %v461
      %v515 = vadd.f32 %v514, %v464
      %v516 = vadd.f32 %v515, %v469
      %v517 = vadd.f32 %v516, %v472
      %v518 = vadd.f32 %v517, %v477
      %v519 = vadd.f32 %v518, %v480
      %v520 = vadd.f32 %v519, %v485
      %v521 = vadd.f32 %v520, %v488
      %v522 = vrot.slane %v521, 4
      %v523 = vadd.f32 %v521, %v522
      %v524 = vrot.slane %v523, 2
      %v525 = vadd.f32 %v523, %v524
      %v526 = vrot.slane %v525, 1
      %v527 = vadd.f32 %v525, %v526
      %v528 = vmul.f32 %v365, %v365
      %v529 = vmul.f32 %v368, %v368
      %v530 = vmul.f32 %v373, %v373
      %v531 = vmul.f32 %v376, %v376
      %v532 = vmul.f32 %v381, %v381
      %v533 = vmul.f32 %v384, %v384
      %v534 = vmul.f32 %v389, %v389
      %v535 = vmul.f32 %v392, %v392
      %v536 = vmul.f32 %v397, %v397
      %v537 = vmul.f32 %v400, %v400
      %v538 = vmul.f32 %v405, %v405
      %v539 = vmul.f32 %v408, %v408
      %v540 = vmul.f32 %v413, %v413
      %v541 = vmul.f32 %v416, %v416
      %v542 = vmul.f32 %v421, %v421
      %v543 = vmul.f32 %v424, %v424
      %v544 = vmul.f32 %v429, %v429
      %v545 = vmul.f32 %v432, %v432
      %v546 = vmul.f32 %v437, %v437
      %v547 = vmul.f32 %v440, %v440
      %v548 = vmul.f32 %v445, %v445
      %v549 = vmul.f32 %v448, %v448
      %v550 = vmul.f32 %v453, %v453
      %v551 = vmul.f32 %v456, %v456
      %v552 = vmul.f32 %v461, %v461
      %v553 = vmul.f32 %v464, %v464
      %v554 = vmul.f32 %v469, %v469
      %v555 = vmul.f32 %v472, %v472
      %v556 = vmul.f32 %v477, %v477
      %v557 = vmul.f32 %v480, %v480
      %v558 = vmul.f32 %v485, %v485
      %v559 = vmul.f32 %v488, %v488
      %v560 = vadd.f32 %v528, %v529
      %v561 = vadd.f32 %v560, %v530
      %v562 = vadd.f32 %v561, %v531
      %v563 = vadd.f32 %v562, %v532
      %v564 = vadd.f32 %v563, %v533
      %v565 = vadd.f32 %v564, %v534
      %v566 = vadd.f32 %v565, %v535
      %v567 = vadd.f32 %v566, %v536
      %v568 = vadd.f32 %v567, %v537
      %v569 = vadd.f32 %v568, %v538
      %v570 = vadd.f32 %v569, %v539
      %v571 = vadd.f32 %v570, %v540
      %v572 = vadd.f32 %v571, %v541
      %v573 = vadd.f32 %v572, %v542
      %v574 = vadd.f32 %v573, %v543
      %v575 = vadd.f32 %v574, %v544
      %v576 = vadd.f32 %v575, %v545
      %v577 = vadd.f32 %v576, %v546
      %v578 = vadd.f32 %v577, %v547
      %v579 = vadd.f32 %v578, %v548
      %v580 = vadd.f32 %v579, %v549
      %v581 = vadd.f32 %v580, %v550
      %v582 = vadd.f32 %v581, %v551
      %v583 = vadd.f32 %v582, %v552
      %v584 = vadd.f32 %v583, %v553
      %v585 = vadd.f32 %v584, %v554
      %v586 = vadd.f32 %v585, %v555
      %v587 = vadd.f32 %v586, %v556
      %v588 = vadd.f32 %v587, %v557
      %v589 = vadd.f32 %v588, %v558
      %v590 = vadd.f32 %v589, %v559
      %v591 = vrot.slane %v590, 4
      %v592 = vadd.f32 %v590, %v591
      %v593 = vrot.slane %v592, 2
      %v594 = vadd.f32 %v592, %v593
      %v595 = vrot.slane %v594, 1
      %v596 = vadd.f32 %v594, %v595
      %v597 = vlaneseq
      %v598 = vshrl.u32 %v597, 7
      %vm599 = vcmp.eq.s32.totalorder %v598, 0
      %vm600 = vcmp.eq.s32.totalorder %v598, 1
      %v601 = vsel %vm600, %v596, 0.0
      %v602 = vsel %vm599, %v527, %v601
      %603 = vst [vmem:[%s143] sm:$0xff] %v602
      %p604 = scmp.lt.s32.totalorder %s13, 1
      %s605 = scalar_select %p604, %s13, 1
      %s606 = smul.addr %s605, 8
      %s607 = scalar_lea.vmem %s2, %s606
      // Predicated region
      $region29: #{basic_conv.2} parent=27 // pred_check
        %p608 = pneg %p78
      $region30: #{basic_conv.2} parent=27 // pred_check_branch
        %610 = sbr.rel (%p608) target = $region32
      $region31: #{basic_conv.2} parent=27 // pred_region
        _
      $region32: #{basic_conv.2} parent=27 // pred_fallthru
        _
    $region28: #{basic_conv.2} parent=5 // pred_fallthru
      _
    %p611 = scmp.le.s32.totalorder 2, %s8
    // Predicated region
    $region33: #{basic_conv.2} parent=5 // pred_check
      %p612 = pneg %p611
    $region34: #{basic_conv.2} parent=5 // pred_check_branch
      %614 = sbr.rel (%p612) target = $region36
    $region35: #{basic_conv.2} parent=5 // pred_region
      %s615 = ssub.s32 %s8, 2
      // Predicated region
      $region37: #{basic_conv.2} parent=35 // pred_check
        %p616 = pneg %p84
      $region38: #{basic_conv.2} parent=35 // pred_check_branch
        %618 = sbr.rel (%p616) target = $region40
      $region39: #{basic_conv.2} parent=35 // pred_region
        %p619 = scmp.lt.s32.totalorder %s14, 1
        %s620 = scalar_select %p619, %s14, 1
        %s621 = smul.addr %s620, 8
        %s622 = scalar_lea.vmem %s2, %s621
      $region40: #{basic_conv.2} parent=35 // pred_fallthru
        _
    $region36: #{basic_conv.2} parent=5 // pred_fallthru
      _
  $region6: #{basic_conv.2} parent=0 // loop_footer
    %s12 = sadd.s32 1, %s8
  $region7: #{basic_conv.2} parent=0 // loop_footer_branch
    %7 = sbr.rel target = $region3
  $region8: #{basic_conv.2} parent=0 // loop_exit
    _

// kernel: basic_conv.3
$region0: #{basic_conv.3}
  #allocation0 [shape = 'u32[]', space=smem, size = 0x4, offset = 0x4, fixed_abs, tag = 'smem constant byte address 0x4 - core index']
  #allocation1 [shape = 'u32[144,128]{1,0:T(1,128)}', space=vmem, size = 0x12000, scoped, tag = 'internal scratch']
  %s0 = inlined_call_operand.vmem [shape: bf16[512,48], index: 0, kind: input, shape index: {}]
  %s1 = inlined_call_operand.vmem [shape: bf16[48,128], index: 1, kind: input, shape index: {}]
  %s2 = inlined_call_operand.vmem [shape: f32[1,128], index: 2, kind: input, shape index: {}]
  %s3 = inlined_call_operand.vmem [shape: f32[1,128], index: 3, kind: input, shape index: {}]
  %s4 = inlined_call_operand.vmem [shape: bf16[512,128], index: 4, kind: output, shape index: {}]
  %s5 = sld [smem:[#allocation0]]
  $region49: #{basic_conv.3} parent=0
    _
  %s7 = ssub.s32 1, %s5
  %s8 = scalar_select 0, %s7, %s5
  loop: start=0, step=1, limit=4
  $region2: #{basic_conv.3} parent=0 // loop_pre_header
    _
  $region3: #{basic_conv.3} parent=0 // loop_header
    %s10 = sphi 0, %s14
    %p11 = scmp.ge.s32.totalorder %s10, 4
    %s20 = sphi 0, %s22
    %s23 = sphi 0, %s20
    %s24 = sphi 0, %s23
    %s40 = sphi 0, %s24
    %s44 = sphi 0, %s44
    %s46 = sphi 0, %s44
    %s47 = sphi 0, %s46
    %s61 = sphi 0, %s47
    %s65 = sphi 0, %s65
    %s67 = sphi 0, %s65
    %s68 = sphi 0, %s67
    %s82 = sphi 0, %s68
    %s86 = sphi 0, %s86
    %s88 = sphi 0, %s86
    %s89 = sphi 0, %s88
    %s103 = sphi 0, %s89
    %s109 = sphi 0, %s111
    %s112 = sphi 0, %s109
    %s113 = sphi 0, %s112
    %s129 = sphi 0, %s113
  $region4: #{basic_conv.3} parent=0 // loop_header_branch
    %13 = sbr.rel (%p11) target = $region8
  $region5: #{basic_conv.3} parent=0 // loop_body
    %s15 = ssub.s32 %s10, 1
    %s16 = ssub.s32 %s10, 2
    %s17 = sadd.s32 %s10, 1
    %s18 = ssub.s32 %s10, %s17
    %p19 = scmp.eq.s32.totalorder %s18, 0
    %s21 = sadd.s32 %s20, 1
    %s22 = scalar_select %p19, %s20, %s21
    %p25 = pneg %p19
    %p26 = scmp.eq.s32.totalorder %s10, 1
    %p27 = por %p25, %p26
    %p28 = scmp.ne.s32.totalorder %s20, %s23
    %p29 = scmp.eq.s32.totalorder %s10, 0
    %p30 = por %p28, %p29
    %p31 = scmp.ne.s32.totalorder %s20, %s23
    %p32 = scmp.eq.s32.totalorder %s15, 1
    %p33 = por %p31, %p32
    %p34 = scmp.ne.s32.totalorder %s23, %s24
    %p35 = scmp.eq.s32.totalorder %s15, 0
    %p36 = por %p34, %p35
    %p37 = scmp.ne.s32.totalorder %s23, %s24
    %p38 = scmp.eq.s32.totalorder %s16, 1
    %p39 = por %p37, %p38
    %p41 = scmp.ne.s32.totalorder %s24, %s40
    %p42 = scmp.eq.s32.totalorder %s16, 0
    %p43 = por %p41, %p42
    %s45 = sadd.s32 %s44, 1
    %p48 = scmp.eq.s32.totalorder %s10, 1
    %p49 = scmp.ne.s32.totalorder %s44, %s46
    %p50 = scmp.eq.s32.totalorder %s10, 0
    %p51 = por %p49, %p50
    %p52 = scmp.ne.s32.totalorder %s44, %s46
    %p53 = scmp.eq.s32.totalorder %s15, 1
    %p54 = por %p52, %p53
    %p55 = scmp.ne.s32.totalorder %s46, %s47
    %p56 = scmp.eq.s32.totalorder %s15, 0
    %p57 = por %p55, %p56
    %p58 = scmp.ne.s32.totalorder %s46, %s47
    %p59 = scmp.eq.s32.totalorder %s16, 1
    %p60 = por %p58, %p59
    %p62 = scmp.ne.s32.totalorder %s47, %s61
    %p63 = scmp.eq.s32.totalorder %s16, 0
    %p64 = por %p62, %p63
    %s66 = sadd.s32 %s65, 1
    %p69 = scmp.eq.s32.totalorder %s10, 1
    %p70 = scmp.ne.s32.totalorder %s65, %s67
    %p71 = scmp.eq.s32.totalorder %s10, 0
    %p72 = por %p70, %p71
    %p73 = scmp.ne.s32.totalorder %s65, %s67
    %p74 = scmp.eq.s32.totalorder %s15, 1
    %p75 = por %p73, %p74
    %p76 = scmp.ne.s32.totalorder %s67, %s68
    %p77 = scmp.eq.s32.totalorder %s15, 0
    %p78 = por %p76, %p77
    %p79 = scmp.ne.s32.totalorder %s67, %s68
    %p80 = scmp.eq.s32.totalorder %s16, 1
    %p81 = por %p79, %p80
    %p83 = scmp.ne.s32.totalorder %s68, %s82
    %p84 = scmp.eq.s32.totalorder %s16, 0
    %p85 = por %p83, %p84
    %s87 = sadd.s32 %s86, 1
    %p90 = scmp.eq.s32.totalorder %s10, 1
    %p91 = scmp.ne.s32.totalorder %s86, %s88
    %p92 = scmp.eq.s32.totalorder %s10, 0
    %p93 = por %p91, %p92
    %p94 = scmp.ne.s32.totalorder %s86, %s88
    %p95 = scmp.eq.s32.totalorder %s15, 1
    %p96 = por %p94, %p95
    %p97 = scmp.ne.s32.totalorder %s88, %s89
    %p98 = scmp.eq.s32.totalorder %s15, 0
    %p99 = por %p97, %p98
    %p100 = scmp.ne.s32.totalorder %s88, %s89
    %p101 = scmp.eq.s32.totalorder %s16, 1
    %p102 = por %p100, %p101
    %p104 = scmp.ne.s32.totalorder %s89, %s103
    %p105 = scmp.eq.s32.totalorder %s16, 0
    %p106 = por %p104, %p105
    %s107 = ssub.s32 %s10, %s17
    %p108 = scmp.eq.s32.totalorder %s107, 0
    %s110 = sadd.s32 %s109, 1
    %s111 = scalar_select %p108, %s109, %s110
    %p114 = pneg %p108
    %p115 = scmp.eq.s32.totalorder %s10, 1
    %p116 = por %p114, %p115
    %p117 = scmp.ne.s32.totalorder %s109, %s112
    %p118 = scmp.eq.s32.totalorder %s10, 0
    %p119 = por %p117, %p118
    %p120 = scmp.ne.s32.totalorder %s109, %s112
    %p121 = scmp.eq.s32.totalorder %s15, 1
    %p122 = por %p120, %p121
    %p123 = scmp.ne.s32.totalorder %s112, %s113
    %p124 = scmp.eq.s32.totalorder %s15, 0
    %p125 = por %p123, %p124
    %p126 = scmp.ne.s32.totalorder %s112, %s113
    %p127 = scmp.eq.s32.totalorder %s16, 1
    %p128 = por %p126, %p127
    %p130 = scmp.ne.s32.totalorder %s113, %s129
    %p131 = scmp.eq.s32.totalorder %s16, 0
    %p132 = por %p130, %p131
    %p133 = scmp.le.s32.totalorder 1, %s10
    %p134 = scmp.lt.s32.totalorder %s10, 3
    %p135 = pnand %p133, %p134
    %p136 = pneg %p135
    // Predicated region
    $region9: #{basic_conv.3} parent=5 // pred_check
      _
    $region10: #{basic_conv.3} parent=5 // pred_check_branch
      %138 = sbr.rel (%p135) target = $region12
    $region11: #{basic_conv.3} parent=5 // pred_region
      %s139 = ssub.s32 %s10, 1
      // Predicated region
      $region13: #{basic_conv.3} parent=11 // pred_check
        %p140 = pneg %p57
      $region14: #{basic_conv.3} parent=11 // pred_check_branch
        %142 = sbr.rel (%p140) target = $region16
      $region15: #{basic_conv.3} parent=11 // pred_region
        _
      $region16: #{basic_conv.3} parent=11 // pred_fallthru
        _
      // Predicated region
      $region17: #{basic_conv.3} parent=11 // pred_check
        %p143 = pneg %p78
      $region18: #{basic_conv.3} parent=11 // pred_check_branch
        %145 = sbr.rel (%p143) target = $region20
      $region19: #{basic_conv.3} parent=11 // pred_region
        _
      $region20: #{basic_conv.3} parent=11 // pred_fallthru
        _
      // Predicated region
      $region21: #{basic_conv.3} parent=11 // pred_check
        %p146 = pneg %p99
      $region22: #{basic_conv.3} parent=11 // pred_check_branch
        %148 = sbr.rel (%p146) target = $region24
      $region23: #{basic_conv.3} parent=11 // pred_region
        _
      $region24: #{basic_conv.3} parent=11 // pred_fallthru
        _
    $region12: #{basic_conv.3} parent=5 // pred_fallthru
      _
    %p149 = scmp.lt.s32.totalorder %s10, 2
    // Predicated region
    $region25: #{basic_conv.3} parent=5 // pred_check
      %p150 = pneg %p149
    $region26: #{basic_conv.3} parent=5 // pred_check_branch
      %152 = sbr.rel (%p150) target = $region28
    $region27: #{basic_conv.3} parent=5 // pred_region
      // Predicated region
      $region29: #{basic_conv.3} parent=27 // pred_check
        %p153 = pneg %p30
      $region30: #{basic_conv.3} parent=27 // pred_check_branch
        %155 = sbr.rel (%p153) target = $region32
      $region31: #{basic_conv.3} parent=27 // pred_region
        %s156 = smul.u32 32, %s10
        %p157 = scmp.lt.s32.totalorder %s156, 63
        %s158 = scalar_select %p157, %s156, 63
        %s159 = smul.addr %s158, 4
        %s160 = scalar_lea.vmem %s0, %s159
        %s161 = smul.u32 32, %s10
      $region32: #{basic_conv.3} parent=27 // pred_fallthru
        _
    $region28: #{basic_conv.3} parent=5 // pred_fallthru
      _
    %p162 = scmp.le.s32.totalorder 1, %s10
    %p163 = scmp.lt.s32.totalorder %s10, 3
    %p164 = pnand %p162, %p163
    %p165 = pneg %p164
    // Predicated region
    $region33: #{basic_conv.3} parent=5 // pred_check
      _
    $region34: #{basic_conv.3} parent=5 // pred_check_branch
      %167 = sbr.rel (%p164) target = $region36
    $region35: #{basic_conv.3} parent=5 // pred_region
      %s168 = ssub.s32 %s10, 1
      %s169 = smul.u32 32, %s15
      %p170 = scmp.lt.s32.totalorder %s169, 63
      %s171 = scalar_select %p170, %s169, 63
      %s172 = smul.addr %s171, 4
      %s173 = scalar_lea.vmem %s0, %s172
      %p174 = pneg %p36
      %p175 = pneg %p33
      %p176 = pneg %p57
      %p177 = pneg %p54
      %p178 = pneg %p78
      %p179 = pneg %p75
      %p180 = pneg %p99
      %p181 = pneg %p96
      %p182 = pneg %p125
      %p183 = pneg %p122
      %s184 = smul.u32 32, %s15
      %p185 = scmp.lt.s32.totalorder %s184, 63
      %s186 = scalar_select %p185, %s184, 63
      %s187 = smul.addr %s186, 4
      %s188 = scalar_lea.vmem %s4, %s187
      %s189 = smul.u32 32, %s15
      %p190 = scmp.lt.s32.totalorder %s189, 63
      %s191 = scalar_select %p190, %s189, 63
      %s192 = smul.addr %s191, 4
      %s193 = scalar_lea.vmem %s0, %s192
      %s194 = smul.u32 32, %s15
      %s195 = smul.u32 32, %s15
      %p196 = scmp.lt.s32.totalorder %s195, 63
      %s197 = scalar_select %p196, %s195, 63
      %s198 = smul.addr %s197, 4
      %s199 = scalar_lea.vmem %s4, %s198
      %s200 = smul.u32 32, %s15
      %v202 = vld [vmem:[%s193] sm:$0xf]
      %v203 = vld [vmem:[%s193 + $0x4] sm:$0xf]
      %v204 = vld [vmem:[%s193 + $0x8] sm:$0xf]
      %v205 = vld [vmem:[%s193 + $0xc] sm:$0xf]
      %v206 = vld [vmem:[%s193 + $0x10] sm:$0xf]
      %v207 = vld [vmem:[%s193 + $0x14] sm:$0xf]
      %v208 = vld [vmem:[%s193 + $0x18] sm:$0xf]
      %v209 = vld [vmem:[%s193 + $0x1c] sm:$0xf]
      %v210 = vld [vmem:[%s193 + $0x20] sm:$0xf]
      %v211 = vld [vmem:[%s193 + $0x24] sm:$0xf]
      %v212 = vld [vmem:[%s193 + $0x28] sm:$0xf]
      %v213 = vld [vmem:[%s193 + $0x2c] sm:$0xf]
      %v214 = vld [vmem:[%s193 + $0x30] sm:$0xf]
      %v215 = vld [vmem:[%s193 + $0x34] sm:$0xf]
      %v216 = vld [vmem:[%s193 + $0x38] sm:$0xf]
      %v217 = vld [vmem:[%s193 + $0x3c] sm:$0xf]
      %v218 = vld [vmem:[%s193 + $0x40] sm:$0xf]
      %v219 = vld [vmem:[%s193 + $0x44] sm:$0xf]
      %v220 = vld [vmem:[%s193 + $0x48] sm:$0xf]
      %v221 = vld [vmem:[%s193 + $0x4c] sm:$0xf]
      %v222 = vld [vmem:[%s193 + $0x50] sm:$0xf]
      %v223 = vld [vmem:[%s193 + $0x54] sm:$0xf]
      %v224 = vld [vmem:[%s193 + $0x58] sm:$0xf]
      %v225 = vld [vmem:[%s193 + $0x5c] sm:$0xf]
      %v226 = vld [vmem:[%s193 + $0x60] sm:$0xf]
      %v227 = vld [vmem:[%s193 + $0x64] sm:$0xf]
      %v228 = vld [vmem:[%s193 + $0x68] sm:$0xf]
      %v229 = vld [vmem:[%s193 + $0x6c] sm:$0xf]
      %v230 = vld [vmem:[%s193 + $0x70] sm:$0xf]
      %v231 = vld [vmem:[%s193 + $0x74] sm:$0xf]
      %v232 = vld [vmem:[%s193 + $0x78] sm:$0xf]
      %v233 = vld [vmem:[%s193 + $0x7c] sm:$0xf]
      %v234 = vld [vmem:[%s1] sm:$0xf]
      %v235 = vld [vmem:[%s1 + $0x4] sm:$0xf]
      %v236 = vld [vmem:[%s1 + $0x8] sm:$0xf]
      %v237 = vld [vmem:[%s1 + $0xc] sm:$0xf]
      %v238 = vld [vmem:[%s1 + $0x10] sm:$0xf]
      %v239 = vld [vmem:[%s1 + $0x14] sm:$0xf]
      %v272 = vunpack.c.l.b16 %v202
      %v273 = vunpack.c.l.b16 %v203
      %v274 = vunpack.c.l.b16 %v204
      %v275 = vunpack.c.l.b16 %v205
      %v276 = vunpack.c.l.b16 %v206
      %v277 = vunpack.c.l.b16 %v207
      %v278 = vunpack.c.l.b16 %v208
      %v279 = vunpack.c.l.b16 %v209
      %v280 = vunpack.c.l.b16 %v210
      %v281 = vunpack.c.l.b16 %v211
      %v282 = vunpack.c.l.b16 %v212
      %v283 = vunpack.c.l.b16 %v213
      %v284 = vunpack.c.l.b16 %v214
      %v285 = vunpack.c.l.b16 %v215
      %v286 = vunpack.c.l.b16 %v216
      %v287 = vunpack.c.l.b16 %v217
      %v288 = vunpack.c.l.b16 %v218
      %v289 = vunpack.c.l.b16 %v219
      %v290 = vunpack.c.l.b16 %v220
      %v291 = vunpack.c.l.b16 %v221
      %v292 = vunpack.c.l.b16 %v222
      %v293 = vunpack.c.l.b16 %v223
      %v294 = vunpack.c.l.b16 %v224
      %v295 = vunpack.c.l.b16 %v225
      %v296 = vunpack.c.l.b16 %v226
      %v297 = vunpack.c.l.b16 %v227
      %v298 = vunpack.c.l.b16 %v228
      %v299 = vunpack.c.l.b16 %v229
      %v300 = vunpack.c.l.b16 %v230
      %v301 = vunpack.c.l.b16 %v231
      %v302 = vunpack.c.l.b16 %v232
      %v303 = vunpack.c.l.b16 %v233
      %v304 = vpack.c.b16 %v273, %v272
      %v305 = vpack.c.b16 %v275, %v274
      %v306 = vpack.c.b16 %v277, %v276
      %v307 = vpack.c.b16 %v279, %v278
      %v308 = vpack.c.b16 %v281, %v280
      %v309 = vpack.c.b16 %v283, %v282
      %v310 = vpack.c.b16 %v285, %v284
      %v311 = vpack.c.b16 %v287, %v286
      %v312 = vpack.c.b16 %v289, %v288
      %v313 = vpack.c.b16 %v291, %v290
      %v314 = vpack.c.b16 %v293, %v292
      %v315 = vpack.c.b16 %v295, %v294
      %v316 = vpack.c.b16 %v297, %v296
      %v317 = vpack.c.b16 %v299, %v298
      %v318 = vpack.c.b16 %v301, %v300
      %v319 = vpack.c.b16 %v303, %v302
      %v326 = vunpack.c.l.b16 %v234
      %v327 = vunpack.c.l.b16 %v235
      %v328 = vunpack.c.l.b16 %v236
      %v329 = vunpack.c.l.b16 %v237
      %v330 = vunpack.c.l.b16 %v238
      %v331 = vunpack.c.l.b16 %v239
      %v332 = vpack.c.b16 %v327, %v326
      %v333 = vpack.c.b16 %v329, %v328
      %v334 = vpack.c.b16 %v331, %v330
      %vm338 = vcmask 392192
      %v340 = vsel %vm338, %v304, 0
      %v343 = vsel %vm338, %v305, 0
      %v346 = vsel %vm338, %v306, 0
      %v349 = vsel %vm338, %v307, 0
      %v352 = vsel %vm338, %v308, 0
      %v355 = vsel %vm338, %v309, 0
      %v358 = vsel %vm338, %v310, 0
      %v361 = vsel %vm338, %v311, 0
      %v364 = vsel %vm338, %v312, 0
      %v367 = vsel %vm338, %v313, 0
      %v370 = vsel %vm338, %v314, 0
      %v373 = vsel %vm338, %v315, 0
      %v376 = vsel %vm338, %v316, 0
      %v379 = vsel %vm338, %v317, 0
      %v382 = vsel %vm338, %v318, 0
      %v385 = vsel %vm338, %v319, 0
      %387 = vmatprep.subr.bf16.mxu0 0
      %388 = vmatpush1.bf16.msra.mxu0 %v332
      %389 = vmatprep.subr.bf16.mxu0 0
      %390 = vmatpush1.bf16.msra.mxu0 %v333
      %391 = vmatprep.subr.bf16.mxu0 0
      %392 = vmatpush1.bf16.msra.mxu0 %v334
      %393 = vmatprep.subr.bf16.mxu0 0
      %394 = vmatpush1.bf16.msra.mxu0 0
      %395 = vmatprep.subr.bf16.mxu0 0
      %396 = vmatpush1.bf16.msra.mxu0 0
      %397 = vmatprep.subr.bf16.mxu0 0
      %398 = vmatpush1.bf16.msra.mxu0 0
      %399 = vmatprep.subr.bf16.mxu0 0
      %400 = vmatpush1.bf16.msra.mxu0 0
      %401 = vmatprep.subr.bf16.mxu0 0
      %402 = vmatpush1.bf16.msra.mxu0 0
      %403 = vmatprep.subr.bf16.mxu0 0
      %404 = vmatpush1.bf16.msra.mxu0 0
      %405 = vmatprep.subr.bf16.mxu0 0
      %406 = vmatpush1.bf16.msra.mxu0 0
      %407 = vmatprep.subr.bf16.mxu0 0
      %408 = vmatpush1.bf16.msra.mxu0 0
      %409 = vmatprep.subr.bf16.mxu0 0
      %410 = vmatpush1.bf16.msra.mxu0 0
      %411 = vmatprep.subr.bf16.mxu0 0
      %412 = vmatpush1.bf16.msra.mxu0 0
      %413 = vmatprep.subr.bf16.mxu0 0
      %414 = vmatpush1.bf16.msra.mxu0 0
      %415 = vmatprep.subr.bf16.mxu0 0
      %416 = vmatpush1.bf16.msra.mxu0 0
      %417 = vmatprep.subr.bf16.mxu0 0
      %418 = vmatpush1.bf16.msra.mxu0 0
      %419 = vmatprep.mubr.bf16.mxu0 0
      %420 = vmatmul.mubr.bf16.gmra.mrb[0].mxu0 %v340
      %v421 = vpop.f32.mrb[0].mxu0
      %v422 = vadd.f32 0.0, %v421
      %v423 = vpop.f32.mrb[0].mxu0
      %v424 = vpop.f32.mrb[0].mxu0
      %v425 = vadd.f32 0.0, %v424
      %v426 = vpop.f32.mrb[0].mxu0
      %427 = vmatprep.mubr.bf16.mxu0 0
      %428 = vmatmul.mubr.bf16.gmra.mrb[0].mxu0 %v343
      %v429 = vpop.f32.mrb[0].mxu0
      %v430 = vadd.f32 0.0, %v429
      %v431 = vpop.f32.mrb[0].mxu0
      %v432 = vpop.f32.mrb[0].mxu0
      %v433 = vadd.f32 0.0, %v432
      %v434 = vpop.f32.mrb[0].mxu0
      %435 = vmatprep.mubr.bf16.mxu0 0
      %436 = vmatmul.mubr.bf16.gmra.mrb[0].mxu0 %v346
      %v437 = vpop.f32.mrb[0].mxu0
      %v438 = vadd.f32 0.0, %v437
      %v439 = vpop.f32.mrb[0].mxu0
      %v440 = vpop.f32.mrb[0].mxu0
      %v441 = vadd.f32 0.0, %v440
      %v442 = vpop.f32.mrb[0].mxu0
      %443 = vmatprep.mubr.bf16.mxu0 0
      %444 = vmatmul.mubr.bf16.gmra.mrb[0].mxu0 %v349
      %v445 = vpop.f32.mrb[0].mxu0
      %v446 = vadd.f32 0.0, %v445
      %v447 = vpop.f32.mrb[0].mxu0
      %v448 = vpop.f32.mrb[0].mxu0
      %v449 = vadd.f32 0.0, %v448
      %v450 = vpop.f32.mrb[0].mxu0
      %451 = vmatprep.mubr.bf16.mxu0 0
      %452 = vmatmul.mubr.bf16.gmra.mrb[0].mxu0 %v352
      %v453 = vpop.f32.mrb[0].mxu0
      %v454 = vadd.f32 0.0, %v453
      %v455 = vpop.f32.mrb[0].mxu0
      %v456 = vpop.f32.mrb[0].mxu0
      %v457 = vadd.f32 0.0, %v456
      %v458 = vpop.f32.mrb[0].mxu0
      %459 = vmatprep.mubr.bf16.mxu0 0
      %460 = vmatmul.mubr.bf16.gmra.mrb[0].mxu0 %v355
      %v461 = vpop.f32.mrb[0].mxu0
      %v462 = vadd.f32 0.0, %v461
      %v463 = vpop.f32.mrb[0].mxu0
      %v464 = vpop.f32.mrb[0].mxu0
      %v465 = vadd.f32 0.0, %v464
      %v466 = vpop.f32.mrb[0].mxu0
      %467 = vmatprep.mubr.bf16.mxu0 0
      %468 = vmatmul.mubr.bf16.gmra.mrb[0].mxu0 %v358
      %v469 = vpop.f32.mrb[0].mxu0
      %v470 = vadd.f32 0.0, %v469
      %v471 = vpop.f32.mrb[0].mxu0
      %v472 = vpop.f32.mrb[0].mxu0
      %v473 = vadd.f32 0.0, %v472
      %v474 = vpop.f32.mrb[0].mxu0
      %475 = vmatprep.mubr.bf16.mxu0 0
      %476 = vmatmul.mubr.bf16.gmra.mrb[0].mxu0 %v361
      %v477 = vpop.f32.mrb[0].mxu0
      %v478 = vadd.f32 0.0, %v477
      %v479 = vpop.f32.mrb[0].mxu0
      %v480 = vpop.f32.mrb[0].mxu0
      %v481 = vadd.f32 0.0, %v480
      %v482 = vpop.f32.mrb[0].mxu0
      %483 = vmatprep.mubr.bf16.mxu0 0
      %484 = vmatmul.mubr.bf16.gmra.mrb[0].mxu0 %v364
      %v485 = vpop.f32.mrb[0].mxu0
      %v486 = vadd.f32 0.0, %v485
      %v487 = vpop.f32.mrb[0].mxu0
      %v488 = vpop.f32.mrb[0].mxu0
      %v489 = vadd.f32 0.0, %v488
      %v490 = vpop.f32.mrb[0].mxu0
      %491 = vmatprep.mubr.bf16.mxu0 0
      %492 = vmatmul.mubr.bf16.gmra.mrb[0].mxu0 %v367
      %v493 = vpop.f32.mrb[0].mxu0
      %v494 = vadd.f32 0.0, %v493
      %v495 = vpop.f32.mrb[0].mxu0
      %v496 = vpop.f32.mrb[0].mxu0
      %v497 = vadd.f32 0.0, %v496
      %v498 = vpop.f32.mrb[0].mxu0
      %499 = vmatprep.mubr.bf16.mxu0 0
      %500 = vmatmul.mubr.bf16.gmra.mrb[0].mxu0 %v370
      %v501 = vpop.f32.mrb[0].mxu0
      %v502 = vadd.f32 0.0, %v501
      %v503 = vpop.f32.mrb[0].mxu0
      %v504 = vpop.f32.mrb[0].mxu0
      %v505 = vadd.f32 0.0, %v504
      %v506 = vpop.f32.mrb[0].mxu0
      %507 = vmatprep.mubr.bf16.mxu0 0
      %508 = vmatmul.mubr.bf16.gmra.mrb[0].mxu0 %v373
      %v509 = vpop.f32.mrb[0].mxu0
      %v510 = vadd.f32 0.0, %v509
      %v511 = vpop.f32.mrb[0].mxu0
      %v512 = vpop.f32.mrb[0].mxu0
      %v513 = vadd.f32 0.0, %v512
      %v514 = vpop.f32.mrb[0].mxu0
      %515 = vmatprep.mubr.bf16.mxu0 0
      %516 = vmatmul.mubr.bf16.gmra.mrb[0].mxu0 %v376
      %v517 = vpop.f32.mrb[0].mxu0
      %v518 = vadd.f32 0.0, %v517
      %v519 = vpop.f32.mrb[0].mxu0
      %v520 = vpop.f32.mrb[0].mxu0
      %v521 = vadd.f32 0.0, %v520
      %v522 = vpop.f32.mrb[0].mxu0
      %523 = vmatprep.mubr.bf16.mxu0 0
      %524 = vmatmul.mubr.bf16.gmra.mrb[0].mxu0 %v379
      %v525 = vpop.f32.mrb[0].mxu0
      %v526 = vadd.f32 0.0, %v525
      %v527 = vpop.f32.mrb[0].mxu0
      %v528 = vpop.f32.mrb[0].mxu0
      %v529 = vadd.f32 0.0, %v528
      %v530 = vpop.f32.mrb[0].mxu0
      %531 = vmatprep.mubr.bf16.mxu0 0
      %532 = vmatmul.mubr.bf16.gmra.mrb[0].mxu0 %v382
      %v533 = vpop.f32.mrb[0].mxu0
      %v534 = vadd.f32 0.0, %v533
      %v535 = vpop.f32.mrb[0].mxu0
      %v536 = vpop.f32.mrb[0].mxu0
      %v537 = vadd.f32 0.0, %v536
      %v538 = vpop.f32.mrb[0].mxu0
      %539 = vmatprep.mubr.bf16.mxu0 0
      %540 = vmatmul.mubr.bf16.gmra.mrb[0].mxu0 %v385
      %v541 = vpop.f32.mrb[0].mxu0
      %v542 = vadd.f32 0.0, %v541
      %v543 = vpop.f32.mrb[0].mxu0
      %v544 = vpop.f32.mrb[0].mxu0
      %v545 = vadd.f32 0.0, %v544
      %v546 = vpop.f32.mrb[0].mxu0
      %547 = vdwg.mxu0
      %v548 = vld [vmem:[%s2] sm:$0x1]
      %v550 = vlaneseq
      %v551 = vshrl.u32 %v550, 7
      %v552 = vsub.s32 0, %v551
      %v553 = vrot.slane %v548, %v552
      %v555 = vmul.f32 %v422, %v553
      %v556 = vmul.f32 %v425, %v553
      %v557 = vmul.f32 %v430, %v553
      %v558 = vmul.f32 %v433, %v553
      %v559 = vmul.f32 %v438, %v553
      %v560 = vmul.f32 %v441, %v553
      %v561 = vmul.f32 %v446, %v553
      %v562 = vmul.f32 %v449, %v553
      %v563 = vmul.f32 %v454, %v553
      %v564 = vmul.f32 %v457, %v553
      %v565 = vmul.f32 %v462, %v553
      %v566 = vmul.f32 %v465, %v553
      %v567 = vmul.f32 %v470, %v553
      %v568 = vmul.f32 %v473, %v553
      %v569 = vmul.f32 %v478, %v553
      %v570 = vmul.f32 %v481, %v553
      %v571 = vmul.f32 %v486, %v553
      %v572 = vmul.f32 %v489, %v553
      %v573 = vmul.f32 %v494, %v553
      %v574 = vmul.f32 %v497, %v553
      %v575 = vmul.f32 %v502, %v553
      %v576 = vmul.f32 %v505, %v553
      %v577 = vmul.f32 %v510, %v553
      %v578 = vmul.f32 %v513, %v553
      %v579 = vmul.f32 %v518, %v553
      %v580 = vmul.f32 %v521, %v553
      %v581 = vmul.f32 %v526, %v553
      %v582 = vmul.f32 %v529, %v553
      %v583 = vmul.f32 %v534, %v553
      %v584 = vmul.f32 %v537, %v553
      %v585 = vmul.f32 %v542, %v553
      %v586 = vmul.f32 %v545, %v553
      %v587 = vld [vmem:[%s3] sm:$0x1]
      %v589 = vlaneseq
      %v590 = vshrl.u32 %v589, 7
      %v591 = vsub.s32 0, %v590
      %v592 = vrot.slane %v587, %v591
      %v594 = vadd.f32 %v555, %v592
      %v595 = vadd.f32 %v556, %v592
      %v596 = vadd.f32 %v557, %v592
      %v597 = vadd.f32 %v558, %v592
      %v598 = vadd.f32 %v559, %v592
      %v599 = vadd.f32 %v560, %v592
      %v600 = vadd.f32 %v561, %v592
      %v601 = vadd.f32 %v562, %v592
      %v602 = vadd.f32 %v563, %v592
      %v603 = vadd.f32 %v564, %v592
      %v604 = vadd.f32 %v565, %v592
      %v605 = vadd.f32 %v566, %v592
      %v606 = vadd.f32 %v567, %v592
      %v607 = vadd.f32 %v568, %v592
      %v608 = vadd.f32 %v569, %v592
      %v609 = vadd.f32 %v570, %v592
      %v610 = vadd.f32 %v571, %v592
      %v611 = vadd.f32 %v572, %v592
      %v612 = vadd.f32 %v573, %v592
      %v613 = vadd.f32 %v574, %v592
      %v614 = vadd.f32 %v575, %v592
      %v615 = vadd.f32 %v576, %v592
      %v616 = vadd.f32 %v577, %v592
      %v617 = vadd.f32 %v578, %v592
      %v618 = vadd.f32 %v579, %v592
      %v619 = vadd.f32 %v580, %v592
      %v620 = vadd.f32 %v581, %v592
      %v621 = vadd.f32 %v582, %v592
      %v622 = vadd.f32 %v583, %v592
      %v623 = vadd.f32 %v584, %v592
      %v624 = vadd.f32 %v585, %v592
      %v625 = vadd.f32 %v586, %v592
      %vm626 = vcmp.ge.f32.partialorder %v594, 0.0
      %vm627 = vcmp.ge.f32.partialorder %v595, 0.0
      %vm628 = vcmp.ge.f32.partialorder %v596, 0.0
      %vm629 = vcmp.ge.f32.partialorder %v597, 0.0
      %vm630 = vcmp.ge.f32.partialorder %v598, 0.0
      %vm631 = vcmp.ge.f32.partialorder %v599, 0.0
      %vm632 = vcmp.ge.f32.partialorder %v600, 0.0
      %vm633 = vcmp.ge.f32.partialorder %v601, 0.0
      %vm634 = vcmp.ge.f32.partialorder %v602, 0.0
      %vm635 = vcmp.ge.f32.partialorder %v603, 0.0
      %vm636 = vcmp.ge.f32.partialorder %v604, 0.0
      %vm637 = vcmp.ge.f32.partialorder %v605, 0.0
      %vm638 = vcmp.ge.f32.partialorder %v606, 0.0
      %vm639 = vcmp.ge.f32.partialorder %v607, 0.0
      %vm640 = vcmp.ge.f32.partialorder %v608, 0.0
      %vm641 = vcmp.ge.f32.partialorder %v609, 0.0
      %vm642 = vcmp.ge.f32.partialorder %v610, 0.0
      %vm643 = vcmp.ge.f32.partialorder %v611, 0.0
      %vm644 = vcmp.ge.f32.partialorder %v612, 0.0
      %vm645 = vcmp.ge.f32.partialorder %v613, 0.0
      %vm646 = vcmp.ge.f32.partialorder %v614, 0.0
      %vm647 = vcmp.ge.f32.partialorder %v615, 0.0
      %vm648 = vcmp.ge.f32.partialorder %v616, 0.0
      %vm649 = vcmp.ge.f32.partialorder %v617, 0.0
      %vm650 = vcmp.ge.f32.partialorder %v618, 0.0
      %vm651 = vcmp.ge.f32.partialorder %v619, 0.0
      %vm652 = vcmp.ge.f32.partialorder %v620, 0.0
      %vm653 = vcmp.ge.f32.partialorder %v621, 0.0
      %vm654 = vcmp.ge.f32.partialorder %v622, 0.0
      %vm655 = vcmp.ge.f32.partialorder %v623, 0.0
      %vm656 = vcmp.ge.f32.partialorder %v624, 0.0
      %vm657 = vcmp.ge.f32.partialorder %v625, 0.0
      %v658 = vmul.f32 %v594, 0.1
      %v659 = vmul.f32 %v595, 0.1
      %v660 = vmul.f32 %v596, 0.1
      %v661 = vmul.f32 %v597, 0.1
      %v662 = vmul.f32 %v598, 0.1
      %v663 = vmul.f32 %v599, 0.1
      %v664 = vmul.f32 %v600, 0.1
      %v665 = vmul.f32 %v601, 0.1
      %v666 = vmul.f32 %v602, 0.1
      %v667 = vmul.f32 %v603, 0.1
      %v668 = vmul.f32 %v604, 0.1
      %v669 = vmul.f32 %v605, 0.1
      %v670 = vmul.f32 %v606, 0.1
      %v671 = vmul.f32 %v607, 0.1
      %v672 = vmul.f32 %v608, 0.1
      %v673 = vmul.f32 %v609, 0.1
      %v674 = vmul.f32 %v610, 0.1
      %v675 = vmul.f32 %v611, 0.1
      %v676 = vmul.f32 %v612, 0.1
      %v677 = vmul.f32 %v613, 0.1
      %v678 = vmul.f32 %v614, 0.1
      %v679 = vmul.f32 %v615, 0.1
      %v680 = vmul.f32 %v616, 0.1
      %v681 = vmul.f32 %v617, 0.1
      %v682 = vmul.f32 %v618, 0.1
      %v683 = vmul.f32 %v619, 0.1
      %v684 = vmul.f32 %v620, 0.1
      %v685 = vmul.f32 %v621, 0.1
      %v686 = vmul.f32 %v622, 0.1
      %v687 = vmul.f32 %v623, 0.1
      %v688 = vmul.f32 %v624, 0.1
      %v689 = vmul.f32 %v625, 0.1
      %v690 = vsel %vm626, %v594, %v658
      %v691 = vsel %vm627, %v595, %v659
      %v692 = vsel %vm628, %v596, %v660
      %v693 = vsel %vm629, %v597, %v661
      %v694 = vsel %vm630, %v598, %v662
      %v695 = vsel %vm631, %v599, %v663
      %v696 = vsel %vm632, %v600, %v664
      %v697 = vsel %vm633, %v601, %v665
      %v698 = vsel %vm634, %v602, %v666
      %v699 = vsel %vm635, %v603, %v667
      %v700 = vsel %vm636, %v604, %v668
      %v701 = vsel %vm637, %v605, %v669
      %v702 = vsel %vm638, %v606, %v670
      %v703 = vsel %vm639, %v607, %v671
      %v704 = vsel %vm640, %v608, %v672
      %v705 = vsel %vm641, %v609, %v673
      %v706 = vsel %vm642, %v610, %v674
      %v707 = vsel %vm643, %v611, %v675
      %v708 = vsel %vm644, %v612, %v676
      %v709 = vsel %vm645, %v613, %v677
      %v710 = vsel %vm646, %v614, %v678
      %v711 = vsel %vm647, %v615, %v679
      %v712 = vsel %vm648, %v616, %v680
      %v713 = vsel %vm649, %v617, %v681
      %v714 = vsel %vm650, %v618, %v682
      %v715 = vsel %vm651, %v619, %v683
      %v716 = vsel %vm652, %v620, %v684
      %v717 = vsel %vm653, %v621, %v685
      %v718 = vsel %vm654, %v622, %v686
      %v719 = vsel %vm655, %v623, %v687
      %v720 = vsel %vm656, %v624, %v688
      %v721 = vsel %vm657, %v625, %v689
      %v722 = vpack.c.bf16 %v691, %v690
      %v723 = vpack.c.bf16 %v693, %v692
      %v724 = vpack.c.bf16 %v695, %v694
      %v725 = vpack.c.bf16 %v697, %v696
      %v726 = vpack.c.bf16 %v699, %v698
      %v727 = vpack.c.bf16 %v701, %v700
      %v728 = vpack.c.bf16 %v703, %v702
      %v729 = vpack.c.bf16 %v705, %v704
      %v730 = vpack.c.bf16 %v707, %v706
      %v731 = vpack.c.bf16 %v709, %v708
      %v732 = vpack.c.bf16 %v711, %v710
      %v733 = vpack.c.bf16 %v713, %v712
      %v734 = vpack.c.bf16 %v715, %v714
      %v735 = vpack.c.bf16 %v717, %v716
      %v736 = vpack.c.bf16 %v719, %v718
      %v737 = vpack.c.bf16 %v721, %v720
      %v754 = vunpack.c.l.b16 %v722
      %v755 = vunpack.c.h.b16 %v722
      %v756 = vunpack.c.l.b16 %v723
      %v757 = vunpack.c.h.b16 %v723
      %v758 = vunpack.c.l.b16 %v724
      %v759 = vunpack.c.h.b16 %v724
      %v760 = vunpack.c.l.b16 %v725
      %v761 = vunpack.c.h.b16 %v725
      %v762 = vunpack.c.l.b16 %v726
      %v763 = vunpack.c.h.b16 %v726
      %v764 = vunpack.c.l.b16 %v727
      %v765 = vunpack.c.h.b16 %v727
      %v766 = vunpack.c.l.b16 %v728
      %v767 = vunpack.c.h.b16 %v728
      %v768 = vunpack.c.l.b16 %v729
      %v769 = vunpack.c.h.b16 %v729
      %v770 = vunpack.c.l.b16 %v730
      %v771 = vunpack.c.h.b16 %v730
      %v772 = vunpack.c.l.b16 %v731
      %v773 = vunpack.c.h.b16 %v731
      %v774 = vunpack.c.l.b16 %v732
      %v775 = vunpack.c.h.b16 %v732
      %v776 = vunpack.c.l.b16 %v733
      %v777 = vunpack.c.h.b16 %v733
      %v778 = vunpack.c.l.b16 %v734
      %v779 = vunpack.c.h.b16 %v734
      %v780 = vunpack.c.l.b16 %v735
      %v781 = vunpack.c.h.b16 %v735
      %v782 = vunpack.c.l.b16 %v736
      %v783 = vunpack.c.h.b16 %v736
      %v784 = vunpack.c.l.b16 %v737
      %v785 = vunpack.c.h.b16 %v737
      %v786 = vpack.c.b16 %v754, %v754
      %v787 = vpack.c.b16 %v755, %v755
      %v788 = vpack.c.b16 %v756, %v756
      %v789 = vpack.c.b16 %v757, %v757
      %v790 = vpack.c.b16 %v758, %v758
      %v791 = vpack.c.b16 %v759, %v759
      %v792 = vpack.c.b16 %v760, %v760
      %v793 = vpack.c.b16 %v761, %v761
      %v794 = vpack.c.b16 %v762, %v762
      %v795 = vpack.c.b16 %v763, %v763
      %v796 = vpack.c.b16 %v764, %v764
      %v797 = vpack.c.b16 %v765, %v765
      %v798 = vpack.c.b16 %v766, %v766
      %v799 = vpack.c.b16 %v767, %v767
      %v800 = vpack.c.b16 %v768, %v768
      %v801 = vpack.c.b16 %v769, %v769
      %v802 = vpack.c.b16 %v770, %v770
      %v803 = vpack.c.b16 %v771, %v771
      %v804 = vpack.c.b16 %v772, %v772
      %v805 = vpack.c.b16 %v773, %v773
      %v806 = vpack.c.b16 %v774, %v774
      %v807 = vpack.c.b16 %v775, %v775
      %v808 = vpack.c.b16 %v776, %v776
      %v809 = vpack.c.b16 %v777, %v777
      %v810 = vpack.c.b16 %v778, %v778
      %v811 = vpack.c.b16 %v779, %v779
      %v812 = vpack.c.b16 %v780, %v780
      %v813 = vpack.c.b16 %v781, %v781
      %v814 = vpack.c.b16 %v782, %v782
      %v815 = vpack.c.b16 %v783, %v783
      %v816 = vpack.c.b16 %v784, %v784
      %v817 = vpack.c.b16 %v785, %v785
      %850 = vst [vmem:[%s199] sm:$0xf] %v786
      %851 = vst [vmem:[%s199 + $0x4] sm:$0xf] %v787
      %852 = vst [vmem:[%s199 + $0x8] sm:$0xf] %v788
      %853 = vst [vmem:[%s199 + $0xc] sm:$0xf] %v789
      %854 = vst [vmem:[%s199 + $0x10] sm:$0xf] %v790
      %855 = vst [vmem:[%s199 + $0x14] sm:$0xf] %v791
      %856 = vst [vmem:[%s199 + $0x18] sm:$0xf] %v792
      %857 = vst [vmem:[%s199 + $0x1c] sm:$0xf] %v793
      %858 = vst [vmem:[%s199 + $0x20] sm:$0xf] %v794
      %859 = vst [vmem:[%s199 + $0x24] sm:$0xf] %v795
      %860 = vst [vmem:[%s199 + $0x28] sm:$0xf] %v796
      %861 = vst [vmem:[%s199 + $0x2c] sm:$0xf] %v797
      %862 = vst [vmem:[%s199 + $0x30] sm:$0xf] %v798
      %863 = vst [vmem:[%s199 + $0x34] sm:$0xf] %v799
      %864 = vst [vmem:[%s199 + $0x38] sm:$0xf] %v800
      %865 = vst [vmem:[%s199 + $0x3c] sm:$0xf] %v801
      %866 = vst [vmem:[%s199 + $0x40] sm:$0xf] %v802
      %867 = vst [vmem:[%s199 + $0x44] sm:$0xf] %v803
      %868 = vst [vmem:[%s199 + $0x48] sm:$0xf] %v804
      %869 = vst [vmem:[%s199 + $0x4c] sm:$0xf] %v805
      %870 = vst [vmem:[%s199 + $0x50] sm:$0xf] %v806
      %871 = vst [vmem:[%s199 + $0x54] sm:$0xf] %v807
      %872 = vst [vmem:[%s199 + $0x58] sm:$0xf] %v808
      %873 = vst [vmem:[%s199 + $0x5c] sm:$0xf] %v809
      %874 = vst [vmem:[%s199 + $0x60] sm:$0xf] %v810
      %875 = vst [vmem:[%s199 + $0x64] sm:$0xf] %v811
      %876 = vst [vmem:[%s199 + $0x68] sm:$0xf] %v812
      %877 = vst [vmem:[%s199 + $0x6c] sm:$0xf] %v813
      %878 = vst [vmem:[%s199 + $0x70] sm:$0xf] %v814
      %879 = vst [vmem:[%s199 + $0x74] sm:$0xf] %v815
      %880 = vst [vmem:[%s199 + $0x78] sm:$0xf] %v816
      %881 = vst [vmem:[%s199 + $0x7c] sm:$0xf] %v817
      %s882 = smul.u32 32, %s15
      %p883 = scmp.lt.s32.totalorder %s882, 63
      %s884 = scalar_select %p883, %s882, 63
      %s885 = smul.addr %s884, 4
      %s886 = scalar_lea.vmem %s4, %s885
      // Predicated region
      $region37: #{basic_conv.3} parent=35 // pred_check
        %p887 = pneg %p122
      $region38: #{basic_conv.3} parent=35 // pred_check_branch
        %889 = sbr.rel (%p887) target = $region40
      $region39: #{basic_conv.3} parent=35 // pred_region
        %s890 = smul.u32 32, %s15
      $region40: #{basic_conv.3} parent=35 // pred_fallthru
        _
    $region36: #{basic_conv.3} parent=5 // pred_fallthru
      _
    %p891 = scmp.le.s32.totalorder 2, %s10
    // Predicated region
    $region41: #{basic_conv.3} parent=5 // pred_check
      %p892 = pneg %p891
    $region42: #{basic_conv.3} parent=5 // pred_check_branch
      %894 = sbr.rel (%p892) target = $region44
    $region43: #{basic_conv.3} parent=5 // pred_region
      %s895 = ssub.s32 %s10, 2
      // Predicated region
      $region45: #{basic_conv.3} parent=43 // pred_check
        %p896 = pneg %p128
      $region46: #{basic_conv.3} parent=43 // pred_check_branch
        %898 = sbr.rel (%p896) target = $region48
      $region47: #{basic_conv.3} parent=43 // pred_region
        %s899 = smul.u32 32, %s16
        %p900 = scmp.lt.s32.totalorder %s899, 63
        %s901 = scalar_select %p900, %s899, 63
        %s902 = smul.addr %s901, 4
        %s903 = scalar_lea.vmem %s4, %s902
      $region48: #{basic_conv.3} parent=43 // pred_fallthru
        _
    $region44: #{basic_conv.3} parent=5 // pred_fallthru
      _
  $region6: #{basic_conv.3} parent=0 // loop_footer
    %s14 = sadd.s32 1, %s10
  $region7: #{basic_conv.3} parent=0 // loop_footer_branch
    %9 = sbr.rel target = $region3
  $region8: #{basic_conv.3} parent=0 // loop_exit
    _

</llo_original>
